<compile_context>
chip_gen: v7x
topology: tpu7x:2x2x1
jax: 0.10.0
libtpu: 0.0.40
codegen_flags: <defaults>
</compile_context>

<pallas_src>
import math
import jax
import jax.numpy as jnp
from jax.experimental import pallas as pl
from jax.experimental.pallas import tpu as pltpu


_EPS = 1e-5
_LEAKY_SLOPE = 0.01

# Small per-node parameter tables live in SMEM and are read as scalars.
_SMEM = pl.BlockSpec(memory_space=pltpu.MemorySpace.SMEM)


def _leaky(h):
    return jnp.where(h >= 0, h, _LEAKY_SLOPE * h)


# ----------------------------------------------------------------------------
# Kernel bodies.  Blocks are node-major 3-D: (num_node, bt_groups, features).
# ----------------------------------------------------------------------------
def ieblock12_kernel(x_ref, w1_ref, b1_ref, w2_ref, b2_ref, wo_ref, bo_ref,
                     aw_ref, ab_ref, wc_ref, bc_ref, wcp_ref, bcp_ref, o_ref):
    """Stacked layer_1 / layer_2 IEBlock with chunk_proj fused as epilogue.

    x_ref : (M, bt, C) node-major input block     (M = num_chunks)
    o_ref : (bt, Dout) chunk-projected output block
    """
    l = pl.program_id(0)                       # which stacked layer (0 or 1)
    M = x_ref.shape[0]

    w1 = w1_ref[...]; b1 = b1_ref[...]
    w2 = w2_ref[...]; b2 = b2_ref[...]
    wo = wo_ref[...]; bo = bo_ref[...]

    f, std, mean = [], [], []
    for m in range(M):                                     # unrolled, M small
        xm = x_ref[m]                                      # (bt, C)
        mu = jnp.mean(xm, axis=-1, keepdims=True)
        xc = xm - mu
        var = jnp.mean(xc * xc, axis=-1, keepdims=True)    # unbiased=False
        inv = jax.lax.rsqrt(var + _EPS)                    # single EUP push
        std.append((var + _EPS) * inv)                     # == sqrt(var+eps)
        mean.append(mu)
        xa = (xc * inv) * aw_ref[l, m] + ab_ref[l, m]      # per-node affine
        h = jnp.dot(xa, w1, preferred_element_type=jnp.float32) + b1
        f.append(jnp.dot(_leaky(h), w2,
                         preferred_element_type=jnp.float32) + b2)   # (bt, F)

    acc = None
    for k in range(M):
        # residual + channel_proj over nodes: M scalar FMAs on (bt, F) slabs
        z = f[k] + bc_ref[l, k]
        for m in range(M):
            z = z + wc_ref[l, k * M + m] * f[m]
        o = jnp.dot(z, wo, preferred_element_type=jnp.float32) + bo  # (bt, Dout)
        # de-normalize, then fold in the chunk_proj contraction over nodes
        y = (o - ab_ref[l, k]) * (std[k] * (1.0 / aw_ref[l, k])) + mean[k]
        c = wcp_ref[l, k] * y
        acc = c if acc is None else acc + c
    o_ref[...] = (acc + bcp_ref[l, 0]).astype(o_ref.dtype)


def ieblock3_ar_kernel(x_ref, xar_ref, w1_ref, b1_ref, w2_ref, b2_ref,
                       wo_ref, bo_ref, war_ref, bar_ref,
                       aw_ref, ab_ref, wc_ref, bc_ref, o_ref):
    """layer_3 IEBlock with the AR highway matmul + residual add fused.

    x_ref   : (M, bt, 2*Dout) node-major input    (M = enc_in)
    xar_ref : (M, bt, T)      raw series per node (same group order)
    o_ref   : (M, bt, P)
    """
    M = x_ref.shape[0]
    w1 = w1_ref[...]; b1 = b1_ref[...]
    w2 = w2_ref[...]; b2 = b2_ref[...]
    wo = wo_ref[...]; bo = bo_ref[...]
    war = war_ref[...]; bar = bar_ref[...]

    f, std, mean = [], [], []
    for m in range(M):
        xm = x_ref[m]
        mu = jnp.mean(xm, axis=-1, keepdims=True)
        xc = xm - mu
        var = jnp.mean(xc * xc, axis=-1, keepdims=True)
        inv = jax.lax.rsqrt(var + _EPS)
        std.append((var + _EPS) * inv)
        mean.append(mu)
        xa = (xc * inv) * aw_ref[0, m] + ab_ref[0, m]
        h = jnp.dot(xa, w1, preferred_element_type=jnp.float32) + b1
        f.append(jnp.dot(_leaky(h), w2,
                         preferred_element_type=jnp.float32) + b2)

    for k in range(M):
        z = f[k] + bc_ref[0, k]
        for m in range(M):
            z = z + wc_ref[0, k * M + m] * f[m]
        o = jnp.dot(z, wo, preferred_element_type=jnp.float32) + bo
        y = (o - ab_ref[0, k]) * (std[k] * (1.0 / aw_ref[0, k])) + mean[k]
        hw = jnp.dot(xar_ref[k], war, preferred_element_type=jnp.float32) + bar
        o_ref[k] = (y + hw).astype(o_ref.dtype)


# ----------------------------------------------------------------------------
# Wrappers
# ----------------------------------------------------------------------------
def _choose_groups(n_groups, target_groups=2048, min_blocks=2):
    """Groups-per-block (bt) and padded group count.

    The tiled group axis is the 2nd-minor dim of every blocked operand, so a
    partial block needs bt % 8 == 0 (f32 sublane rule).  Prefer >=min_blocks
    blocks (v7x has two TensorCores); when the group count is too small to
    split into aligned tiles, use a single full (unpadded) block.
    """
    if n_groups < 8 * min_blocks:
        return n_groups, n_groups
    bt = min(target_groups, n_groups // min_blocks)
    bt = max(8, (bt // 8) * 8)
    n_pad = -(-n_groups // bt) * bt
    return bt, n_pad


def ieblock12_forward(x12, pk, *, target_groups=2048):
    """Stacked layer_1 / layer_2.  x12: (2, M, G, C) -> (2, G, Dout)."""
    _, M, G, C = x12.shape
    H = pk['w1'].shape[2]
    F = pk['w2'].shape[2]
    Dout = pk['wo'].shape[2]
    bt, Gp = _choose_groups(G, target_groups)
    if Gp != G:
        x12 = jnp.pad(x12, ((0, 0), (0, 0), (0, Gp - G), (0, 0)))
    nb = Gp // bt

    wmap = lambda l, i: (l, 0, 0)            # layer-stacked constants
    out = pl.pallas_call(
        ieblock12_kernel,
        out_shape=jax.ShapeDtypeStruct((2, Gp, Dout), jnp.float32),
        grid=(2, nb),
        in_specs=[
            pl.BlockSpec((None, M, bt, C), lambda l, i: (l, 0, i, 0)),   # x
            pl.BlockSpec((None, C, H), wmap),                            # w1
            pl.BlockSpec((None, 1, H), wmap),                            # b1
            pl.BlockSpec((None, H, F), wmap),                            # w2
            pl.BlockSpec((None, 1, F), wmap),                            # b2
            pl.BlockSpec((None, F, Dout), wmap),                         # wo
            pl.BlockSpec((None, 1, Dout), wmap),                         # bo
            _SMEM,  # aw  (2, M)
            _SMEM,  # ab  (2, M)
            _SMEM,  # wc  (2, M*M)
            _SMEM,  # bc  (2, M)
            _SMEM,  # wcp (2, M)
            _SMEM,  # bcp (2, 1)
        ],
        out_specs=pl.BlockSpec((None, bt, Dout), lambda l, i: (l, i, 0)),
        compiler_params=pltpu.CompilerParams(
            dimension_semantics=("parallel", "parallel")),
    )(x12, pk['w1'], pk['b1'], pk['w2'], pk['b2'], pk['wo'], pk['bo'],
      pk['aw'], pk['ab'], pk['wc'], pk['bc'], pk['wcp'], pk['bcp'])
    return out[:, :G, :] if Gp != G else out


def ieblock3_ar_forward(x3, xar, pk, *, target_groups=2048):
    """layer_3 IEBlock + fused AR highway.  x3: (M, G, 2*Dout), xar: (M, G, T)."""
    M, G, C3 = x3.shape
    T = xar.shape[2]
    H = pk['w1'].shape[1]
    F = pk['w2'].shape[1]
    P = pk['wo'].shape[1]
    bt, Gp = _choose_groups(G, target_groups)
    if Gp != G:
        x3 = jnp.pad(x3, ((0, 0), (0, Gp - G), (0, 0)))
        xar = jnp.pad(xar, ((0, 0), (0, Gp - G), (0, 0)))
    nb = Gp // bt

    wmap = lambda i: (0, 0)
    out = pl.pallas_call(
        ieblock3_ar_kernel,
        out_shape=jax.ShapeDtypeStruct((M, Gp, P), jnp.float32),
        grid=(nb,),
        in_specs=[
            pl.BlockSpec((M, bt, C3), lambda i: (0, i, 0)),   # x3
            pl.BlockSpec((M, bt, T), lambda i: (0, i, 0)),    # xar
            pl.BlockSpec((C3, H), wmap),                      # w1
            pl.BlockSpec((1, H), wmap),                       # b1
            pl.BlockSpec((H, F), wmap),                       # w2
            pl.BlockSpec((1, F), wmap),                       # b2
            pl.BlockSpec((F, P), wmap),                       # wo
            pl.BlockSpec((1, P), wmap),                       # bo
            pl.BlockSpec((T, P), wmap),                       # AR weight
            pl.BlockSpec((1, P), wmap),                       # AR bias
            _SMEM,  # aw (1, M)
            _SMEM,  # ab (1, M)
            _SMEM,  # wc (1, M*M)
            _SMEM,  # bc (1, M)
        ],
        out_specs=pl.BlockSpec((M, bt, P), lambda i: (0, i, 0)),
        compiler_params=pltpu.CompilerParams(dimension_semantics=("parallel",)),
    )(x3, xar, pk['w1'], pk['b1'], pk['w2'], pk['b2'], pk['wo'], pk['bo'],
      pk['war'], pk['bar'], pk['aw'], pk['ab'], pk['wc'], pk['bc'])
    return out[:, :G, :] if Gp != G else out


# ----------------------------------------------------------------------------
# Parameter initialization (PyTorch-style bounds) + kernel-side packing
# ----------------------------------------------------------------------------
def linear_init(key, in_dim, out_dim):
    kw, kb = jax.random.split(key)
    bound = 1.0 / math.sqrt(in_dim)
    w = jax.random.uniform(kw, (in_dim, out_dim), jnp.float32, -bound, bound)
    b = jax.random.uniform(kb, (1, out_dim), jnp.float32, -bound, bound)
    return w, b


def ieblock_init(key, input_dim, hid_dim, f1_size, output_dim, num_node):
    k1, k2, k3, k4, k5, k6, k7 = jax.random.split(key, 7)
    w1, b1 = linear_init(k1, input_dim, hid_dim)
    w2, b2 = linear_init(k2, hid_dim, f1_size)
    bound_c = 1.0 / math.sqrt(num_node)
    # torch init: channel_proj.weight = eye_, affine_weight = 1, affine_bias = 0.
    # Small perturbations keep the affine / channel-mix paths numerically
    # non-trivial so the correctness check actually exercises them.
    wc = (jnp.eye(num_node, dtype=jnp.float32)
          + 0.05 * jax.random.uniform(k5, (num_node, num_node), jnp.float32, -1., 1.))
    bc = jax.random.uniform(k3, (num_node, 1), jnp.float32, -bound_c, bound_c)
    wo, bo = linear_init(k4, f1_size, output_dim)
    aw = 1.0 + 0.1 * jax.random.uniform(k6, (num_node, 1), jnp.float32, -1., 1.)
    ab = 0.1 * jax.random.uniform(k7, (num_node, 1), jnp.float32, -1., 1.)
    return dict(w1=w1, b1=b1, w2=w2, b2=b2, wc=wc, bc=bc, wo=wo, bo=bo, aw=aw, ab=ab)


def _pack_layers12(p1, p2, cp1, cp2):
    stk = lambda k: jnp.stack([p1[k], p2[k]], axis=0)
    vec = lambda a, b: jnp.stack([a.reshape(-1), b.reshape(-1)], axis=0)
    wcp1, bcp1 = cp1
    wcp2, bcp2 = cp2
    return dict(
        w1=stk('w1'), b1=stk('b1'), w2=stk('w2'), b2=stk('b2'),
        wo=stk('wo'), bo=stk('bo'),
        aw=vec(p1['aw'], p2['aw']), ab=vec(p1['ab'], p2['ab']),
        wc=vec(p1['wc'], p2['wc']), bc=vec(p1['bc'], p2['bc']),
        wcp=vec(wcp1, wcp2),
        bcp=jnp.stack([bcp1.reshape(1), bcp2.reshape(1)], axis=0))


def _pack_layer3(p3, ar):
    war, bar = ar
    row = lambda a: a.reshape(1, -1)
    return dict(w1=p3['w1'], b1=p3['b1'], w2=p3['w2'], b2=p3['b2'],
                wo=p3['wo'], bo=p3['bo'],
                aw=row(p3['aw']), ab=row(p3['ab']),
                wc=row(p3['wc']), bc=row(p3['bc']),
                war=war, bar=bar)


def model_init(key, cfg):
    ks = jax.random.split(key, 6)
    cs = min(cfg['pred_len'], cfg['seq_len'], cfg['chunk_size'])
    nc = cfg['seq_len'] // cs
    params = {}
    params['layer_1'] = ieblock_init(ks[0], cs, cfg['hid_dim'], cfg['f1_size'],
                                     cfg['output_dim'], nc)
    params['layer_2'] = ieblock_init(ks[1], cs, cfg['hid_dim'], cfg['f1_size'],
                                     cfg['output_dim'], nc)
    params['layer_3'] = ieblock_init(ks[2], cfg['output_dim'] * 2, cfg['hid_dim'] * 2,
                                     cfg['f1_size'] * 2, cfg['pred_len'], cfg['enc_in'])
    bnd = 1.0 / math.sqrt(nc)
    k1a, k1b = jax.random.split(ks[3])
    params['chunk_proj_1'] = (jax.random.uniform(k1a, (nc,), jnp.float32, -bnd, bnd),
                              jax.random.uniform(k1b, (), jnp.float32, -bnd, bnd))
    k2a, k2b = jax.random.split(ks[4])
    params['chunk_proj_2'] = (jax.random.uniform(k2a, (nc,), jnp.float32, -bnd, bnd),
                              jax.random.uniform(k2b, (), jnp.float32, -bnd, bnd))
    params['ar'] = linear_init(ks[5], cfg['seq_len'], cfg['pred_len'])
    # Kernel-side packed params built ONCE here (hoisted out of the forward).
    params['packed_12'] = _pack_layers12(params['layer_1'], params['layer_2'],
                                         params['chunk_proj_1'],
                                         params['chunk_proj_2'])
    params['packed_3'] = _pack_layer3(params['layer_3'], params['ar'])
    return params


# ----------------------------------------------------------------------------
# Model forward (layout glue in XLA, hot path in Pallas)
# ----------------------------------------------------------------------------
def model_forward(params, cfg, x_enc):
    B, T, N = x_enc.shape
    cs = min(cfg['pred_len'], cfg['seq_len'], cfg['chunk_size'])
    nc = cfg['seq_len'] // cs
    Dout = cfg['output_dim']

    # Node-major chunk views: X[m, g, :] = chunk/node m of group g = b*N + n.
    x1 = x_enc.reshape(B, nc, cs, N).transpose(1, 0, 3, 2).reshape(nc, B * N, cs)
    x2 = x_enc.reshape(B, cs, nc, N).transpose(2, 0, 3, 1).reshape(nc, B * N, cs)
    x12 = jnp.stack([x1, x2], axis=0)                        # (2, nc, B*N, cs)

    out12 = ieblock12_forward(x12, params['packed_12'])      # (2, B*N, Dout)
    x3 = jnp.concatenate([out12[0], out12[1]], axis=-1)      # (B*N, 2*Dout)
    x3 = x3.reshape(B, N, 2 * Dout).transpose(1, 0, 2)       # (N, B, 2*Dout)
    xar = jnp.transpose(x_enc, (2, 0, 1))                    # (N, B, T)

    out3 = ieblock3_ar_forward(x3, xar, params['packed_3'])  # (N, B, P)
    return jnp.transpose(out3, (1, 2, 0))                    # (B, pred_len, N)


# ----------------------------------------------------------------------------
# Pure-JAX reference (for correctness check)
# ----------------------------------------------------------------------------
def ieblock_ref(x, p):
    means = jnp.mean(x, axis=-1, keepdims=True)
    xc = x - means
    std = jnp.sqrt(jnp.var(xc, axis=-1, keepdims=True) + 1e-5)
    xn = xc / std
    xa = xn * p['aw'] + p['ab']
    h = xa @ p['w1'] + p['b1']
    h = jnp.where(h >= 0, h, 0.01 * h)
    f = h @ p['w2'] + p['b2']
    cp = jnp.einsum('km,bmf->bkf', p['wc'], f) + p['bc']
    z = f + cp
    o = z @ p['wo'] + p['bo']
    return ((o - p['ab']) / p['aw']) * std + means


def model_ref(params, cfg, x_enc):
    B, T, N = x_enc.shape
    cs = min(cfg['pred_len'], cfg['seq_len'], cfg['chunk_size'])
    nc = cfg['seq_len'] // cs
    Dout = cfg['output_dim']
    x_nt = jnp.transpose(x_enc, (0, 2, 1))
    w_ar, b_ar = params['ar']
    highway = x_nt @ w_ar + b_ar
    x1 = x_enc.reshape(B, nc, cs, N).transpose(0, 3, 1, 2).reshape(B * N, nc, cs)
    r1 = ieblock_ref(x1, params['layer_1'])
    wcp1, bcp1 = params['chunk_proj_1']
    x1o = jnp.einsum('bmo,m->bo', r1, wcp1) + bcp1
    x2 = x_enc.reshape(B, cs, nc, N).transpose(0, 3, 2, 1).reshape(B * N, nc, cs)
    r2 = ieblock_ref(x2, params['layer_2'])
    wcp2, bcp2 = params['chunk_proj_2']
    x2o = jnp.einsum('bmo,m->bo', r2, wcp2) + bcp2
    x3 = jnp.concatenate([x1o, x2o], axis=-1).reshape(B, N, 2 * Dout)
    r3 = ieblock_ref(x3, params['layer_3'])
    return jnp.transpose(r3 + highway, (0, 2, 1))


# ----------------------------------------------------------------------------
if __name__ == "__main__":
    cfg = dict(seq_len=16, pred_len=8, chunk_size=4, enc_in=4,
               hid_dim=32, f1_size=16, output_dim=16)
    assert cfg['seq_len'] % min(cfg['pred_len'], cfg['seq_len'], cfg['chunk_size']) == 0

    key = jax.random.PRNGKey(0)
    kp, kx = jax.random.split(key)
    params = model_init(kp, cfg)

    B = 2
    x_enc = jax.random.normal(kx, (B, cfg['seq_len'], cfg['enc_in']), jnp.float32)
    # x_mark_enc / x_dec / x_mark_dec are unused by the torch forward pass.

    out = model_forward(params, cfg, x_enc)
    out = jax.block_until_ready(out)

    ref = model_ref(params, cfg, x_enc)
    assert out.shape == (B, cfg['pred_len'], cfg['enc_in'])
    # Tolerance absorbs rsqrt-vs-sqrt/div and MXU accumulation-order deltas.
    assert jnp.allclose(out, ref, rtol=1e-3, atol=1e-3), "mismatch vs JAX reference"

    print("KERNEL_OK")
</pallas_src>

<mosaic_0001>
module attributes {stable_mosaic.version = 11 : i64} {
  func.func @ieblock12_kernel(%arg0: i32, %arg1: i32, %arg2: memref<1x4x8x4xf32, #tpu.memory_space<vmem>>, %arg3: memref<1x4x32xf32, #tpu.memory_space<vmem>>, %arg4: memref<1x1x32xf32, #tpu.memory_space<vmem>>, %arg5: memref<1x32x16xf32, #tpu.memory_space<vmem>>, %arg6: memref<1x1x16xf32, #tpu.memory_space<vmem>>, %arg7: memref<1x16x16xf32, #tpu.memory_space<vmem>>, %arg8: memref<1x1x16xf32, #tpu.memory_space<vmem>>, %arg9: memref<2x4xf32, #tpu.memory_space<smem>>, %arg10: memref<2x4xf32, #tpu.memory_space<smem>>, %arg11: memref<2x16xf32, #tpu.memory_space<smem>>, %arg12: memref<2x4xf32, #tpu.memory_space<smem>>, %arg13: memref<2x4xf32, #tpu.memory_space<smem>>, %arg14: memref<2x1xf32, #tpu.memory_space<smem>>, %arg15: memref<1x8x16xf32, #tpu.memory_space<vmem>>) attributes {dimension_semantics = [#tpu.dimension_semantics<parallel>, #tpu.dimension_semantics<parallel>], iteration_bounds = array<i64: 2, 1>, scalar_prefetch = 0 : i64, scratch_operands = 0 : i64, tpu.core_type = #tpu.core_type<tc>, window_params = [{transform_indices = @transform_0, window_bounds = array<i64: 1, 4, 8, 4>}, {transform_indices = @transform_1, window_bounds = array<i64: 1, 4, 32>}, {transform_indices = @transform_2, window_bounds = array<i64: 1, 1, 32>}, {transform_indices = @transform_3, window_bounds = array<i64: 1, 32, 16>}, {transform_indices = @transform_4, window_bounds = array<i64: 1, 1, 16>}, {transform_indices = @transform_5, window_bounds = array<i64: 1, 16, 16>}, {transform_indices = @transform_6, window_bounds = array<i64: 1, 1, 16>}, {transform_indices = @transform_7, window_bounds = array<i64: 2, 4>}, {transform_indices = @transform_8, window_bounds = array<i64: 2, 4>}, {transform_indices = @transform_9, window_bounds = array<i64: 2, 16>}, {transform_indices = @transform_10, window_bounds = array<i64: 2, 4>}, {transform_indices = @transform_11, window_bounds = array<i64: 2, 4>}, {transform_indices = @transform_12, window_bounds = array<i64: 2, 1>}, {transform_indices = @transform_13, window_bounds = array<i64: 1, 8, 16>}]} {
    %c0 = arith.constant 0 : index
    %c0_0 = arith.constant 0 : index
    %c0_1 = arith.constant 0 : index
    %0 = vector.load %arg3[%c0, %c0_0, %c0_1] : memref<1x4x32xf32, #tpu.memory_space<vmem>>, vector<1x4x32xf32>
    %1 = vector.shape_cast %0 : vector<1x4x32xf32> to vector<4x32xf32>
    %c0_2 = arith.constant 0 : index
    %c0_3 = arith.constant 0 : index
    %c0_4 = arith.constant 0 : index
    %2 = vector.load %arg4[%c0_2, %c0_3, %c0_4] : memref<1x1x32xf32, #tpu.memory_space<vmem>>, vector<1x1x32xf32>
    %3 = vector.shape_cast %2 : vector<1x1x32xf32> to vector<1x32xf32>
    %c0_5 = arith.constant 0 : index
    %c0_6 = arith.constant 0 : index
    %c0_7 = arith.constant 0 : index
    %4 = vector.load %arg5[%c0_5, %c0_6, %c0_7] : memref<1x32x16xf32, #tpu.memory_space<vmem>>, vector<1x32x16xf32>
    %5 = vector.shape_cast %4 : vector<1x32x16xf32> to vector<32x16xf32>
    %c0_8 = arith.constant 0 : index
    %c0_9 = arith.constant 0 : index
    %c0_10 = arith.constant 0 : index
    %6 = vector.load %arg6[%c0_8, %c0_9, %c0_10] : memref<1x1x16xf32, #tpu.memory_space<vmem>>, vector<1x1x16xf32>
    %7 = vector.shape_cast %6 : vector<1x1x16xf32> to vector<1x16xf32>
    %c0_11 = arith.constant 0 : index
    %c0_12 = arith.constant 0 : index
    %c0_13 = arith.constant 0 : index
    %8 = vector.load %arg7[%c0_11, %c0_12, %c0_13] : memref<1x16x16xf32, #tpu.memory_space<vmem>>, vector<1x16x16xf32>
    %9 = vector.shape_cast %8 : vector<1x16x16xf32> to vector<16x16xf32>
    %c0_14 = arith.constant 0 : index
    %c0_15 = arith.constant 0 : index
    %c0_16 = arith.constant 0 : index
    %10 = vector.load %arg8[%c0_14, %c0_15, %c0_16] : memref<1x1x16xf32, #tpu.memory_space<vmem>>, vector<1x1x16xf32>
    %11 = vector.shape_cast %10 : vector<1x1x16xf32> to vector<1x16xf32>
    %c0_17 = arith.constant 0 : index
    %c0_18 = arith.constant 0 : index
    %c0_19 = arith.constant 0 : index
    %c0_20 = arith.constant 0 : index
    %12 = vector.load %arg2[%c0_17, %c0_18, %c0_19, %c0_20] : memref<1x4x8x4xf32, #tpu.memory_space<vmem>>, vector<1x1x8x4xf32>
    %13 = vector.shape_cast %12 : vector<1x1x8x4xf32> to vector<8x4xf32>
    %cst = arith.constant dense<0.000000e+00> : vector<8xf32>
    %14 = vector.multi_reduction <add>, %13, %cst [1] : vector<8x4xf32> to vector<8xf32>
    %15 = vector.shape_cast %14 : vector<8xf32> to vector<8x1xf32>
    %cst_21 = arith.constant 4.000000e+00 : f32
    %16 = vector.broadcast %cst_21 : f32 to vector<8x1xf32>
    %17 = arith.divf %15, %16 : vector<8x1xf32>
    %18 = vector.broadcast %17 : vector<8x1xf32> to vector<8x4xf32>
    %19 = arith.subf %13, %18 : vector<8x4xf32>
    %20 = arith.mulf %19, %19 : vector<8x4xf32>
    %cst_22 = arith.constant dense<0.000000e+00> : vector<8xf32>
    %21 = vector.multi_reduction <add>, %20, %cst_22 [1] : vector<8x4xf32> to vector<8xf32>
    %22 = vector.shape_cast %21 : vector<8xf32> to vector<8x1xf32>
    %cst_23 = arith.constant 4.000000e+00 : f32
    %23 = vector.broadcast %cst_23 : f32 to vector<8x1xf32>
    %24 = arith.divf %22, %23 : vector<8x1xf32>
    %cst_24 = arith.constant 9.99999974E-6 : f32
    %25 = vector.broadcast %cst_24 : f32 to vector<8x1xf32>
    %26 = arith.addf %24, %25 : vector<8x1xf32>
    %27 = math.rsqrt %26 : vector<8x1xf32>
    %cst_25 = arith.constant 9.99999974E-6 : f32
    %28 = vector.broadcast %cst_25 : f32 to vector<8x1xf32>
    %29 = arith.addf %24, %28 : vector<8x1xf32>
    %30 = arith.mulf %29, %27 : vector<8x1xf32>
    %31 = vector.broadcast %27 : vector<8x1xf32> to vector<8x4xf32>
    %32 = arith.mulf %19, %31 : vector<8x4xf32>
    %33 = arith.index_cast %arg0 : i32 to index
    %c0_26 = arith.constant 0 : index
    %34 = memref.load %arg9[%33, %c0_26] : memref<2x4xf32, #tpu.memory_space<smem>>
    %35 = vector.broadcast %34 : f32 to vector<8x4xf32>
    %36 = arith.mulf %32, %35 : vector<8x4xf32>
    %37 = arith.index_cast %arg0 : i32 to index
    %c0_27 = arith.constant 0 : index
    %38 = memref.load %arg10[%37, %c0_27] : memref<2x4xf32, #tpu.memory_space<smem>>
    %39 = vector.broadcast %38 : f32 to vector<8x4xf32>
    %40 = arith.addf %36, %39 : vector<8x4xf32>
    %cst_28 = arith.constant dense<0.000000e+00> : vector<8x32xf32>
    %41 = tpu.matmul %40, %1, %cst_28 {dimension_numbers = #tpu.dot_dimension_numbers<[1], [0], [0], [1], [0, 0, 1, 1], [], []>} : vector<8x4xf32>, vector<4x32xf32>, vector<8x32xf32> -> vector<8x32xf32>
    %42 = vector.broadcast %3 : vector<1x32xf32> to vector<8x32xf32>
    %43 = arith.addf %41, %42 : vector<8x32xf32>
    %cst_29 = arith.constant 0.000000e+00 : f32
    %44 = vector.broadcast %cst_29 : f32 to vector<8x32xf32>
    %45 = arith.cmpf oge, %43, %44 : vector<8x32xf32>
    %cst_30 = arith.constant 0.00999999977 : f32
    %46 = vector.broadcast %cst_30 : f32 to vector<8x32xf32>
    %47 = arith.mulf %46, %43 : vector<8x32xf32>
    %48 = arith.select %45, %43, %47 : vector<8x32xi1>, vector<8x32xf32>
    %cst_31 = arith.constant dense<0.000000e+00> : vector<8x16xf32>
    %49 = tpu.matmul %48, %5, %cst_31 {dimension_numbers = #tpu.dot_dimension_numbers<[1], [0], [0], [1], [0, 0, 1, 1], [], []>} : vector<8x32xf32>, vector<32x16xf32>, vector<8x16xf32> -> vector<8x16xf32>
    %50 = vector.broadcast %7 : vector<1x16xf32> to vector<8x16xf32>
    %51 = arith.addf %49, %50 : vector<8x16xf32>
    %c0_32 = arith.constant 0 : index
    %c1 = arith.constant 1 : index
    %c0_33 = arith.constant 0 : index
    %c0_34 = arith.constant 0 : index
    %52 = vector.load %arg2[%c0_32, %c1, %c0_33, %c0_34] : memref<1x4x8x4xf32, #tpu.memory_space<vmem>>, vector<1x1x8x4xf32>
    %53 = vector.shape_cast %52 : vector<1x1x8x4xf32> to vector<8x4xf32>
    %cst_35 = arith.constant dense<0.000000e+00> : vector<8xf32>
    %54 = vector.multi_reduction <add>, %53, %cst_35 [1] : vector<8x4xf32> to vector<8xf32>
    %55 = vector.shape_cast %54 : vector<8xf32> to vector<8x1xf32>
    %cst_36 = arith.constant 4.000000e+00 : f32
    %56 = vector.broadcast %cst_36 : f32 to vector<8x1xf32>
    %57 = arith.divf %55, %56 : vector<8x1xf32>
    %58 = vector.broadcast %57 : vector<8x1xf32> to vector<8x4xf32>
    %59 = arith.subf %53, %58 : vector<8x4xf32>
    %60 = arith.mulf %59, %59 : vector<8x4xf32>
    %cst_37 = arith.constant dense<0.000000e+00> : vector<8xf32>
    %61 = vector.multi_reduction <add>, %60, %cst_37 [1] : vector<8x4xf32> to vector<8xf32>
    %62 = vector.shape_cast %61 : vector<8xf32> to vector<8x1xf32>
    %cst_38 = arith.constant 4.000000e+00 : f32
    %63 = vector.broadcast %cst_38 : f32 to vector<8x1xf32>
    %64 = arith.divf %62, %63 : vector<8x1xf32>
    %cst_39 = arith.constant 9.99999974E-6 : f32
    %65 = vector.broadcast %cst_39 : f32 to vector<8x1xf32>
    %66 = arith.addf %64, %65 : vector<8x1xf32>
    %67 = math.rsqrt %66 : vector<8x1xf32>
    %cst_40 = arith.constant 9.99999974E-6 : f32
    %68 = vector.broadcast %cst_40 : f32 to vector<8x1xf32>
    %69 = arith.addf %64, %68 : vector<8x1xf32>
    %70 = arith.mulf %69, %67 : vector<8x1xf32>
    %71 = vector.broadcast %67 : vector<8x1xf32> to vector<8x4xf32>
    %72 = arith.mulf %59, %71 : vector<8x4xf32>
    %73 = arith.index_cast %arg0 : i32 to index
    %c1_41 = arith.constant 1 : index
    %74 = memref.load %arg9[%73, %c1_41] : memref<2x4xf32, #tpu.memory_space<smem>>
    %75 = vector.broadcast %74 : f32 to vector<8x4xf32>
    %76 = arith.mulf %72, %75 : vector<8x4xf32>
    %77 = arith.index_cast %arg0 : i32 to index
    %c1_42 = arith.constant 1 : index
    %78 = memref.load %arg10[%77, %c1_42] : memref<2x4xf32, #tpu.memory_space<smem>>
    %79 = vector.broadcast %78 : f32 to vector<8x4xf32>
    %80 = arith.addf %76, %79 : vector<8x4xf32>
    %cst_43 = arith.constant dense<0.000000e+00> : vector<8x32xf32>
    %81 = tpu.matmul %80, %1, %cst_43 {dimension_numbers = #tpu.dot_dimension_numbers<[1], [0], [0], [1], [0, 0, 1, 1], [], []>} : vector<8x4xf32>, vector<4x32xf32>, vector<8x32xf32> -> vector<8x32xf32>
    %82 = vector.broadcast %3 : vector<1x32xf32> to vector<8x32xf32>
    %83 = arith.addf %81, %82 : vector<8x32xf32>
    %cst_44 = arith.constant 0.000000e+00 : f32
    %84 = vector.broadcast %cst_44 : f32 to vector<8x32xf32>
    %85 = arith.cmpf oge, %83, %84 : vector<8x32xf32>
    %cst_45 = arith.constant 0.00999999977 : f32
    %86 = vector.broadcast %cst_45 : f32 to vector<8x32xf32>
    %87 = arith.mulf %86, %83 : vector<8x32xf32>
    %88 = arith.select %85, %83, %87 : vector<8x32xi1>, vector<8x32xf32>
    %cst_46 = arith.constant dense<0.000000e+00> : vector<8x16xf32>
    %89 = tpu.matmul %88, %5, %cst_46 {dimension_numbers = #tpu.dot_dimension_numbers<[1], [0], [0], [1], [0, 0, 1, 1], [], []>} : vector<8x32xf32>, vector<32x16xf32>, vector<8x16xf32> -> vector<8x16xf32>
    %90 = vector.broadcast %7 : vector<1x16xf32> to vector<8x16xf32>
    %91 = arith.addf %89, %90 : vector<8x16xf32>
    %c0_47 = arith.constant 0 : index
    %c2 = arith.constant 2 : index
    %c0_48 = arith.constant 0 : index
    %c0_49 = arith.constant 0 : index
    %92 = vector.load %arg2[%c0_47, %c2, %c0_48, %c0_49] : memref<1x4x8x4xf32, #tpu.memory_space<vmem>>, vector<1x1x8x4xf32>
    %93 = vector.shape_cast %92 : vector<1x1x8x4xf32> to vector<8x4xf32>
    %cst_50 = arith.constant dense<0.000000e+00> : vector<8xf32>
    %94 = vector.multi_reduction <add>, %93, %cst_50 [1] : vector<8x4xf32> to vector<8xf32>
    %95 = vector.shape_cast %94 : vector<8xf32> to vector<8x1xf32>
    %cst_51 = arith.constant 4.000000e+00 : f32
    %96 = vector.broadcast %cst_51 : f32 to vector<8x1xf32>
    %97 = arith.divf %95, %96 : vector<8x1xf32>
    %98 = vector.broadcast %97 : vector<8x1xf32> to vector<8x4xf32>
    %99 = arith.subf %93, %98 : vector<8x4xf32>
    %100 = arith.mulf %99, %99 : vector<8x4xf32>
    %cst_52 = arith.constant dense<0.000000e+00> : vector<8xf32>
    %101 = vector.multi_reduction <add>, %100, %cst_52 [1] : vector<8x4xf32> to vector<8xf32>
    %102 = vector.shape_cast %101 : vector<8xf32> to vector<8x1xf32>
    %cst_53 = arith.constant 4.000000e+00 : f32
    %103 = vector.broadcast %cst_53 : f32 to vector<8x1xf32>
    %104 = arith.divf %102, %103 : vector<8x1xf32>
    %cst_54 = arith.constant 9.99999974E-6 : f32
    %105 = vector.broadcast %cst_54 : f32 to vector<8x1xf32>
    %106 = arith.addf %104, %105 : vector<8x1xf32>
    %107 = math.rsqrt %106 : vector<8x1xf32>
    %cst_55 = arith.constant 9.99999974E-6 : f32
    %108 = vector.broadcast %cst_55 : f32 to vector<8x1xf32>
    %109 = arith.addf %104, %108 : vector<8x1xf32>
    %110 = arith.mulf %109, %107 : vector<8x1xf32>
    %111 = vector.broadcast %107 : vector<8x1xf32> to vector<8x4xf32>
    %112 = arith.mulf %99, %111 : vector<8x4xf32>
    %113 = arith.index_cast %arg0 : i32 to index
    %c2_56 = arith.constant 2 : index
    %114 = memref.load %arg9[%113, %c2_56] : memref<2x4xf32, #tpu.memory_space<smem>>
    %115 = vector.broadcast %114 : f32 to vector<8x4xf32>
    %116 = arith.mulf %112, %115 : vector<8x4xf32>
    %117 = arith.index_cast %arg0 : i32 to index
    %c2_57 = arith.constant 2 : index
    %118 = memref.load %arg10[%117, %c2_57] : memref<2x4xf32, #tpu.memory_space<smem>>
    %119 = vector.broadcast %118 : f32 to vector<8x4xf32>
    %120 = arith.addf %116, %119 : vector<8x4xf32>
    %cst_58 = arith.constant dense<0.000000e+00> : vector<8x32xf32>
    %121 = tpu.matmul %120, %1, %cst_58 {dimension_numbers = #tpu.dot_dimension_numbers<[1], [0], [0], [1], [0, 0, 1, 1], [], []>} : vector<8x4xf32>, vector<4x32xf32>, vector<8x32xf32> -> vector<8x32xf32>
    %122 = vector.broadcast %3 : vector<1x32xf32> to vector<8x32xf32>
    %123 = arith.addf %121, %122 : vector<8x32xf32>
    %cst_59 = arith.constant 0.000000e+00 : f32
    %124 = vector.broadcast %cst_59 : f32 to vector<8x32xf32>
    %125 = arith.cmpf oge, %123, %124 : vector<8x32xf32>
    %cst_60 = arith.constant 0.00999999977 : f32
    %126 = vector.broadcast %cst_60 : f32 to vector<8x32xf32>
    %127 = arith.mulf %126, %123 : vector<8x32xf32>
    %128 = arith.select %125, %123, %127 : vector<8x32xi1>, vector<8x32xf32>
    %cst_61 = arith.constant dense<0.000000e+00> : vector<8x16xf32>
    %129 = tpu.matmul %128, %5, %cst_61 {dimension_numbers = #tpu.dot_dimension_numbers<[1], [0], [0], [1], [0, 0, 1, 1], [], []>} : vector<8x32xf32>, vector<32x16xf32>, vector<8x16xf32> -> vector<8x16xf32>
    %130 = vector.broadcast %7 : vector<1x16xf32> to vector<8x16xf32>
    %131 = arith.addf %129, %130 : vector<8x16xf32>
    %c0_62 = arith.constant 0 : index
    %c3 = arith.constant 3 : index
    %c0_63 = arith.constant 0 : index
    %c0_64 = arith.constant 0 : index
    %132 = vector.load %arg2[%c0_62, %c3, %c0_63, %c0_64] : memref<1x4x8x4xf32, #tpu.memory_space<vmem>>, vector<1x1x8x4xf32>
    %133 = vector.shape_cast %132 : vector<1x1x8x4xf32> to vector<8x4xf32>
    %cst_65 = arith.constant dense<0.000000e+00> : vector<8xf32>
    %134 = vector.multi_reduction <add>, %133, %cst_65 [1] : vector<8x4xf32> to vector<8xf32>
    %135 = vector.shape_cast %134 : vector<8xf32> to vector<8x1xf32>
    %cst_66 = arith.constant 4.000000e+00 : f32
    %136 = vector.broadcast %cst_66 : f32 to vector<8x1xf32>
    %137 = arith.divf %135, %136 : vector<8x1xf32>
    %138 = vector.broadcast %137 : vector<8x1xf32> to vector<8x4xf32>
    %139 = arith.subf %133, %138 : vector<8x4xf32>
    %140 = arith.mulf %139, %139 : vector<8x4xf32>
    %cst_67 = arith.constant dense<0.000000e+00> : vector<8xf32>
    %141 = vector.multi_reduction <add>, %140, %cst_67 [1] : vector<8x4xf32> to vector<8xf32>
    %142 = vector.shape_cast %141 : vector<8xf32> to vector<8x1xf32>
    %cst_68 = arith.constant 4.000000e+00 : f32
    %143 = vector.broadcast %cst_68 : f32 to vector<8x1xf32>
    %144 = arith.divf %142, %143 : vector<8x1xf32>
    %cst_69 = arith.constant 9.99999974E-6 : f32
    %145 = vector.broadcast %cst_69 : f32 to vector<8x1xf32>
    %146 = arith.addf %144, %145 : vector<8x1xf32>
    %147 = math.rsqrt %146 : vector<8x1xf32>
    %cst_70 = arith.constant 9.99999974E-6 : f32
    %148 = vector.broadcast %cst_70 : f32 to vector<8x1xf32>
    %149 = arith.addf %144, %148 : vector<8x1xf32>
    %150 = arith.mulf %149, %147 : vector<8x1xf32>
    %151 = vector.broadcast %147 : vector<8x1xf32> to vector<8x4xf32>
    %152 = arith.mulf %139, %151 : vector<8x4xf32>
    %153 = arith.index_cast %arg0 : i32 to index
    %c3_71 = arith.constant 3 : index
    %154 = memref.load %arg9[%153, %c3_71] : memref<2x4xf32, #tpu.memory_space<smem>>
    %155 = vector.broadcast %154 : f32 to vector<8x4xf32>
    %156 = arith.mulf %152, %155 : vector<8x4xf32>
    %157 = arith.index_cast %arg0 : i32 to index
    %c3_72 = arith.constant 3 : index
    %158 = memref.load %arg10[%157, %c3_72] : memref<2x4xf32, #tpu.memory_space<smem>>
    %159 = vector.broadcast %158 : f32 to vector<8x4xf32>
    %160 = arith.addf %156, %159 : vector<8x4xf32>
    %cst_73 = arith.constant dense<0.000000e+00> : vector<8x32xf32>
    %161 = tpu.matmul %160, %1, %cst_73 {dimension_numbers = #tpu.dot_dimension_numbers<[1], [0], [0], [1], [0, 0, 1, 1], [], []>} : vector<8x4xf32>, vector<4x32xf32>, vector<8x32xf32> -> vector<8x32xf32>
    %162 = vector.broadcast %3 : vector<1x32xf32> to vector<8x32xf32>
    %163 = arith.addf %161, %162 : vector<8x32xf32>
    %cst_74 = arith.constant 0.000000e+00 : f32
    %164 = vector.broadcast %cst_74 : f32 to vector<8x32xf32>
    %165 = arith.cmpf oge, %163, %164 : vector<8x32xf32>
    %cst_75 = arith.constant 0.00999999977 : f32
    %166 = vector.broadcast %cst_75 : f32 to vector<8x32xf32>
    %167 = arith.mulf %166, %163 : vector<8x32xf32>
    %168 = arith.select %165, %163, %167 : vector<8x32xi1>, vector<8x32xf32>
    %cst_76 = arith.constant dense<0.000000e+00> : vector<8x16xf32>
    %169 = tpu.matmul %168, %5, %cst_76 {dimension_numbers = #tpu.dot_dimension_numbers<[1], [0], [0], [1], [0, 0, 1, 1], [], []>} : vector<8x32xf32>, vector<32x16xf32>, vector<8x16xf32> -> vector<8x16xf32>
    %170 = vector.broadcast %7 : vector<1x16xf32> to vector<8x16xf32>
    %171 = arith.addf %169, %170 : vector<8x16xf32>
    %172 = arith.index_cast %arg0 : i32 to index
    %c0_77 = arith.constant 0 : index
    %173 = memref.load %arg12[%172, %c0_77] : memref<2x4xf32, #tpu.memory_space<smem>>
    %174 = vector.broadcast %173 : f32 to vector<8x16xf32>
    %175 = arith.addf %51, %174 : vector<8x16xf32>
    %176 = arith.index_cast %arg0 : i32 to index
    %c0_78 = arith.constant 0 : index
    %177 = memref.load %arg11[%176, %c0_78] : memref<2x16xf32, #tpu.memory_space<smem>>
    %178 = vector.broadcast %177 : f32 to vector<8x16xf32>
    %179 = arith.mulf %178, %51 : vector<8x16xf32>
    %180 = arith.addf %175, %179 : vector<8x16xf32>
    %181 = arith.index_cast %arg0 : i32 to index
    %c1_79 = arith.constant 1 : index
    %182 = memref.load %arg11[%181, %c1_79] : memref<2x16xf32, #tpu.memory_space<smem>>
    %183 = vector.broadcast %182 : f32 to vector<8x16xf32>
    %184 = arith.mulf %183, %91 : vector<8x16xf32>
    %185 = arith.addf %180, %184 : vector<8x16xf32>
    %186 = arith.index_cast %arg0 : i32 to index
    %c2_80 = arith.constant 2 : index
    %187 = memref.load %arg11[%186, %c2_80] : memref<2x16xf32, #tpu.memory_space<smem>>
    %188 = vector.broadcast %187 : f32 to vector<8x16xf32>
    %189 = arith.mulf %188, %131 : vector<8x16xf32>
    %190 = arith.addf %185, %189 : vector<8x16xf32>
    %191 = arith.index_cast %arg0 : i32 to index
    %c3_81 = arith.constant 3 : index
    %192 = memref.load %arg11[%191, %c3_81] : memref<2x16xf32, #tpu.memory_space<smem>>
    %193 = vector.broadcast %192 : f32 to vector<8x16xf32>
    %194 = arith.mulf %193, %171 : vector<8x16xf32>
    %195 = arith.addf %190, %194 : vector<8x16xf32>
    %cst_82 = arith.constant dense<0.000000e+00> : vector<8x16xf32>
    %196 = tpu.matmul %195, %9, %cst_82 {dimension_numbers = #tpu.dot_dimension_numbers<[1], [0], [0], [1], [0, 0, 1, 1], [], []>} : vector<8x16xf32>, vector<16x16xf32>, vector<8x16xf32> -> vector<8x16xf32>
    %197 = vector.broadcast %11 : vector<1x16xf32> to vector<8x16xf32>
    %198 = arith.addf %196, %197 : vector<8x16xf32>
    %199 = arith.index_cast %arg0 : i32 to index
    %c0_83 = arith.constant 0 : index
    %200 = memref.load %arg10[%199, %c0_83] : memref<2x4xf32, #tpu.memory_space<smem>>
    %201 = vector.broadcast %200 : f32 to vector<8x16xf32>
    %202 = arith.subf %198, %201 : vector<8x16xf32>
    %203 = arith.index_cast %arg0 : i32 to index
    %c0_84 = arith.constant 0 : index
    %204 = memref.load %arg9[%203, %c0_84] : memref<2x4xf32, #tpu.memory_space<smem>>
    %cst_85 = arith.constant 1.000000e+00 : f32
    %205 = arith.divf %cst_85, %204 : f32
    %206 = vector.broadcast %205 : f32 to vector<8x1xf32>
    %207 = arith.mulf %30, %206 : vector<8x1xf32>
    %208 = vector.broadcast %207 : vector<8x1xf32> to vector<8x16xf32>
    %209 = arith.mulf %202, %208 : vector<8x16xf32>
    %210 = vector.broadcast %17 : vector<8x1xf32> to vector<8x16xf32>
    %211 = arith.addf %209, %210 : vector<8x16xf32>
    %212 = arith.index_cast %arg0 : i32 to index
    %c0_86 = arith.constant 0 : index
    %213 = memref.load %arg13[%212, %c0_86] : memref<2x4xf32, #tpu.memory_space<smem>>
    %214 = vector.broadcast %213 : f32 to vector<8x16xf32>
    %215 = arith.mulf %214, %211 : vector<8x16xf32>
    %216 = arith.index_cast %arg0 : i32 to index
    %c1_87 = arith.constant 1 : index
    %217 = memref.load %arg12[%216, %c1_87] : memref<2x4xf32, #tpu.memory_space<smem>>
    %218 = vector.broadcast %217 : f32 to vector<8x16xf32>
    %219 = arith.addf %91, %218 : vector<8x16xf32>
    %220 = arith.index_cast %arg0 : i32 to index
    %c4 = arith.constant 4 : index
    %221 = memref.load %arg11[%220, %c4] : memref<2x16xf32, #tpu.memory_space<smem>>
    %222 = vector.broadcast %221 : f32 to vector<8x16xf32>
    %223 = arith.mulf %222, %51 : vector<8x16xf32>
    %224 = arith.addf %219, %223 : vector<8x16xf32>
    %225 = arith.index_cast %arg0 : i32 to index
    %c5 = arith.constant 5 : index
    %226 = memref.load %arg11[%225, %c5] : memref<2x16xf32, #tpu.memory_space<smem>>
    %227 = vector.broadcast %226 : f32 to vector<8x16xf32>
    %228 = arith.mulf %227, %91 : vector<8x16xf32>
    %229 = arith.addf %224, %228 : vector<8x16xf32>
    %230 = arith.index_cast %arg0 : i32 to index
    %c6 = arith.constant 6 : index
    %231 = memref.load %arg11[%230, %c6] : memref<2x16xf32, #tpu.memory_space<smem>>
    %232 = vector.broadcast %231 : f32 to vector<8x16xf32>
    %233 = arith.mulf %232, %131 : vector<8x16xf32>
    %234 = arith.addf %229, %233 : vector<8x16xf32>
    %235 = arith.index_cast %arg0 : i32 to index
    %c7 = arith.constant 7 : index
    %236 = memref.load %arg11[%235, %c7] : memref<2x16xf32, #tpu.memory_space<smem>>
    %237 = vector.broadcast %236 : f32 to vector<8x16xf32>
    %238 = arith.mulf %237, %171 : vector<8x16xf32>
    %239 = arith.addf %234, %238 : vector<8x16xf32>
    %cst_88 = arith.constant dense<0.000000e+00> : vector<8x16xf32>
    %240 = tpu.matmul %239, %9, %cst_88 {dimension_numbers = #tpu.dot_dimension_numbers<[1], [0], [0], [1], [0, 0, 1, 1], [], []>} : vector<8x16xf32>, vector<16x16xf32>, vector<8x16xf32> -> vector<8x16xf32>
    %241 = vector.broadcast %11 : vector<1x16xf32> to vector<8x16xf32>
    %242 = arith.addf %240, %241 : vector<8x16xf32>
    %243 = arith.index_cast %arg0 : i32 to index
    %c1_89 = arith.constant 1 : index
    %244 = memref.load %arg10[%243, %c1_89] : memref<2x4xf32, #tpu.memory_space<smem>>
    %245 = vector.broadcast %244 : f32 to vector<8x16xf32>
    %246 = arith.subf %242, %245 : vector<8x16xf32>
    %247 = arith.index_cast %arg0 : i32 to index
    %c1_90 = arith.constant 1 : index
    %248 = memref.load %arg9[%247, %c1_90] : memref<2x4xf32, #tpu.memory_space<smem>>
    %cst_91 = arith.constant 1.000000e+00 : f32
    %249 = arith.divf %cst_91, %248 : f32
    %250 = vector.broadcast %249 : f32 to vector<8x1xf32>
    %251 = arith.mulf %70, %250 : vector<8x1xf32>
    %252 = vector.broadcast %251 : vector<8x1xf32> to vector<8x16xf32>
    %253 = arith.mulf %246, %252 : vector<8x16xf32>
    %254 = vector.broadcast %57 : vector<8x1xf32> to vector<8x16xf32>
    %255 = arith.addf %253, %254 : vector<8x16xf32>
    %256 = arith.index_cast %arg0 : i32 to index
    %c1_92 = arith.constant 1 : index
    %257 = memref.load %arg13[%256, %c1_92] : memref<2x4xf32, #tpu.memory_space<smem>>
    %258 = vector.broadcast %257 : f32 to vector<8x16xf32>
    %259 = arith.mulf %258, %255 : vector<8x16xf32>
    %260 = arith.addf %215, %259 : vector<8x16xf32>
    %261 = arith.index_cast %arg0 : i32 to index
    %c2_93 = arith.constant 2 : index
    %262 = memref.load %arg12[%261, %c2_93] : memref<2x4xf32, #tpu.memory_space<smem>>
    %263 = vector.broadcast %262 : f32 to vector<8x16xf32>
    %264 = arith.addf %131, %263 : vector<8x16xf32>
    %265 = arith.index_cast %arg0 : i32 to index
    %c8 = arith.constant 8 : index
    %266 = memref.load %arg11[%265, %c8] : memref<2x16xf32, #tpu.memory_space<smem>>
    %267 = vector.broadcast %266 : f32 to vector<8x16xf32>
    %268 = arith.mulf %267, %51 : vector<8x16xf32>
    %269 = arith.addf %264, %268 : vector<8x16xf32>
    %270 = arith.index_cast %arg0 : i32 to index
    %c9 = arith.constant 9 : index
    %271 = memref.load %arg11[%270, %c9] : memref<2x16xf32, #tpu.memory_space<smem>>
    %272 = vector.broadcast %271 : f32 to vector<8x16xf32>
    %273 = arith.mulf %272, %91 : vector<8x16xf32>
    %274 = arith.addf %269, %273 : vector<8x16xf32>
    %275 = arith.index_cast %arg0 : i32 to index
    %c10 = arith.constant 10 : index
    %276 = memref.load %arg11[%275, %c10] : memref<2x16xf32, #tpu.memory_space<smem>>
    %277 = vector.broadcast %276 : f32 to vector<8x16xf32>
    %278 = arith.mulf %277, %131 : vector<8x16xf32>
    %279 = arith.addf %274, %278 : vector<8x16xf32>
    %280 = arith.index_cast %arg0 : i32 to index
    %c11 = arith.constant 11 : index
    %281 = memref.load %arg11[%280, %c11] : memref<2x16xf32, #tpu.memory_space<smem>>
    %282 = vector.broadcast %281 : f32 to vector<8x16xf32>
    %283 = arith.mulf %282, %171 : vector<8x16xf32>
    %284 = arith.addf %279, %283 : vector<8x16xf32>
    %cst_94 = arith.constant dense<0.000000e+00> : vector<8x16xf32>
    %285 = tpu.matmul %284, %9, %cst_94 {dimension_numbers = #tpu.dot_dimension_numbers<[1], [0], [0], [1], [0, 0, 1, 1], [], []>} : vector<8x16xf32>, vector<16x16xf32>, vector<8x16xf32> -> vector<8x16xf32>
    %286 = vector.broadcast %11 : vector<1x16xf32> to vector<8x16xf32>
    %287 = arith.addf %285, %286 : vector<8x16xf32>
    %288 = arith.index_cast %arg0 : i32 to index
    %c2_95 = arith.constant 2 : index
    %289 = memref.load %arg10[%288, %c2_95] : memref<2x4xf32, #tpu.memory_space<smem>>
    %290 = vector.broadcast %289 : f32 to vector<8x16xf32>
    %291 = arith.subf %287, %290 : vector<8x16xf32>
    %292 = arith.index_cast %arg0 : i32 to index
    %c2_96 = arith.constant 2 : index
    %293 = memref.load %arg9[%292, %c2_96] : memref<2x4xf32, #tpu.memory_space<smem>>
    %cst_97 = arith.constant 1.000000e+00 : f32
    %294 = arith.divf %cst_97, %293 : f32
    %295 = vector.broadcast %294 : f32 to vector<8x1xf32>
    %296 = arith.mulf %110, %295 : vector<8x1xf32>
    %297 = vector.broadcast %296 : vector<8x1xf32> to vector<8x16xf32>
    %298 = arith.mulf %291, %297 : vector<8x16xf32>
    %299 = vector.broadcast %97 : vector<8x1xf32> to vector<8x16xf32>
    %300 = arith.addf %298, %299 : vector<8x16xf32>
    %301 = arith.index_cast %arg0 : i32 to index
    %c2_98 = arith.constant 2 : index
    %302 = memref.load %arg13[%301, %c2_98] : memref<2x4xf32, #tpu.memory_space<smem>>
    %303 = vector.broadcast %302 : f32 to vector<8x16xf32>
    %304 = arith.mulf %303, %300 : vector<8x16xf32>
    %305 = arith.addf %260, %304 : vector<8x16xf32>
    %306 = arith.index_cast %arg0 : i32 to index
    %c3_99 = arith.constant 3 : index
    %307 = memref.load %arg12[%306, %c3_99] : memref<2x4xf32, #tpu.memory_space<smem>>
    %308 = vector.broadcast %307 : f32 to vector<8x16xf32>
    %309 = arith.addf %171, %308 : vector<8x16xf32>
    %310 = arith.index_cast %arg0 : i32 to index
    %c12 = arith.constant 12 : index
    %311 = memref.load %arg11[%310, %c12] : memref<2x16xf32, #tpu.memory_space<smem>>
    %312 = vector.broadcast %311 : f32 to vector<8x16xf32>
    %313 = arith.mulf %312, %51 : vector<8x16xf32>
    %314 = arith.addf %309, %313 : vector<8x16xf32>
    %315 = arith.index_cast %arg0 : i32 to index
    %c13 = arith.constant 13 : index
    %316 = memref.load %arg11[%315, %c13] : memref<2x16xf32, #tpu.memory_space<smem>>
    %317 = vector.broadcast %316 : f32 to vector<8x16xf32>
    %318 = arith.mulf %317, %91 : vector<8x16xf32>
    %319 = arith.addf %314, %318 : vector<8x16xf32>
    %320 = arith.index_cast %arg0 : i32 to index
    %c14 = arith.constant 14 : index
    %321 = memref.load %arg11[%320, %c14] : memref<2x16xf32, #tpu.memory_space<smem>>
    %322 = vector.broadcast %321 : f32 to vector<8x16xf32>
    %323 = arith.mulf %322, %131 : vector<8x16xf32>
    %324 = arith.addf %319, %323 : vector<8x16xf32>
    %325 = arith.index_cast %arg0 : i32 to index
    %c15 = arith.constant 15 : index
    %326 = memref.load %arg11[%325, %c15] : memref<2x16xf32, #tpu.memory_space<smem>>
    %327 = vector.broadcast %326 : f32 to vector<8x16xf32>
    %328 = arith.mulf %327, %171 : vector<8x16xf32>
    %329 = arith.addf %324, %328 : vector<8x16xf32>
    %cst_100 = arith.constant dense<0.000000e+00> : vector<8x16xf32>
    %330 = tpu.matmul %329, %9, %cst_100 {dimension_numbers = #tpu.dot_dimension_numbers<[1], [0], [0], [1], [0, 0, 1, 1], [], []>} : vector<8x16xf32>, vector<16x16xf32>, vector<8x16xf32> -> vector<8x16xf32>
    %331 = vector.broadcast %11 : vector<1x16xf32> to vector<8x16xf32>
    %332 = arith.addf %330, %331 : vector<8x16xf32>
    %333 = arith.index_cast %arg0 : i32 to index
    %c3_101 = arith.constant 3 : index
    %334 = memref.load %arg10[%333, %c3_101] : memref<2x4xf32, #tpu.memory_space<smem>>
    %335 = vector.broadcast %334 : f32 to vector<8x16xf32>
    %336 = arith.subf %332, %335 : vector<8x16xf32>
    %337 = arith.index_cast %arg0 : i32 to index
    %c3_102 = arith.constant 3 : index
    %338 = memref.load %arg9[%337, %c3_102] : memref<2x4xf32, #tpu.memory_space<smem>>
    %cst_103 = arith.constant 1.000000e+00 : f32
    %339 = arith.divf %cst_103, %338 : f32
    %340 = vector.broadcast %339 : f32 to vector<8x1xf32>
    %341 = arith.mulf %150, %340 : vector<8x1xf32>
    %342 = vector.broadcast %341 : vector<8x1xf32> to vector<8x16xf32>
    %343 = arith.mulf %336, %342 : vector<8x16xf32>
    %344 = vector.broadcast %137 : vector<8x1xf32> to vector<8x16xf32>
    %345 = arith.addf %343, %344 : vector<8x16xf32>
    %346 = arith.index_cast %arg0 : i32 to index
    %c3_104 = arith.constant 3 : index
    %347 = memref.load %arg13[%346, %c3_104] : memref<2x4xf32, #tpu.memory_space<smem>>
    %348 = vector.broadcast %347 : f32 to vector<8x16xf32>
    %349 = arith.mulf %348, %345 : vector<8x16xf32>
    %350 = arith.addf %305, %349 : vector<8x16xf32>
    %351 = arith.index_cast %arg0 : i32 to index
    %c0_105 = arith.constant 0 : index
    %352 = memref.load %arg14[%351, %c0_105] : memref<2x1xf32, #tpu.memory_space<smem>>
    %353 = vector.broadcast %352 : f32 to vector<8x16xf32>
    %354 = arith.addf %350, %353 : vector<8x16xf32>
    %c0_106 = arith.constant 0 : index
    %c0_107 = arith.constant 0 : index
    %c0_108 = arith.constant 0 : index
    %355 = vector.load %arg15[%c0_106, %c0_107, %c0_108] : memref<1x8x16xf32, #tpu.memory_space<vmem>>, vector<1x8x16xf32>
    %356 = vector.shape_cast %355 : vector<1x8x16xf32> to vector<8x16xf32>
    %357 = vector.shape_cast %354 : vector<8x16xf32> to vector<1x8x16xf32>
    tpu.vector_store %arg15[%c0_106, %c0_107, %c0_108], %357 {strides = array<i32>} : memref<1x8x16xf32, #tpu.memory_space<vmem>>, vector<1x8x16xf32>,
    return
  }
  func.func @transform_0(%arg0: i32, %arg1: i32) -> (i32, i32, i32, i32) {
    %c0_i32 = arith.constant 0 : i32
    %c0_i32_0 = arith.constant 0 : i32
    %c0_i32_1 = arith.constant 0 : i32
    return %arg0, %c0_i32, %arg1, %c0_i32_0 : i32, i32, i32, i32
  }
  func.func @transform_1(%arg0: i32, %arg1: i32) -> (i32, i32, i32) {
    %c0_i32 = arith.constant 0 : i32
    %c0_i32_0 = arith.constant 0 : i32
    %c0_i32_1 = arith.constant 0 : i32
    return %arg0, %c0_i32, %c0_i32_0 : i32, i32, i32
  }
  func.func @transform_2(%arg0: i32, %arg1: i32) -> (i32, i32, i32) {
    %c0_i32 = arith.constant 0 : i32
    %c0_i32_0 = arith.constant 0 : i32
    %c0_i32_1 = arith.constant 0 : i32
    return %arg0, %c0_i32, %c0_i32_0 : i32, i32, i32
  }
  func.func @transform_3(%arg0: i32, %arg1: i32) -> (i32, i32, i32) {
    %c0_i32 = arith.constant 0 : i32
    %c0_i32_0 = arith.constant 0 : i32
    %c0_i32_1 = arith.constant 0 : i32
    return %arg0, %c0_i32, %c0_i32_0 : i32, i32, i32
  }
  func.func @transform_4(%arg0: i32, %arg1: i32) -> (i32, i32, i32) {
    %c0_i32 = arith.constant 0 : i32
    %c0_i32_0 = arith.constant 0 : i32
    %c0_i32_1 = arith.constant 0 : i32
    return %arg0, %c0_i32, %c0_i32_0 : i32, i32, i32
  }
  func.func @transform_5(%arg0: i32, %arg1: i32) -> (i32, i32, i32) {
    %c0_i32 = arith.constant 0 : i32
    %c0_i32_0 = arith.constant 0 : i32
    %c0_i32_1 = arith.constant 0 : i32
    return %arg0, %c0_i32, %c0_i32_0 : i32, i32, i32
  }
  func.func @transform_6(%arg0: i32, %arg1: i32) -> (i32, i32, i32) {
    %c0_i32 = arith.constant 0 : i32
    %c0_i32_0 = arith.constant 0 : i32
    %c0_i32_1 = arith.constant 0 : i32
    return %arg0, %c0_i32, %c0_i32_0 : i32, i32, i32
  }
  func.func @transform_7(%arg0: i32, %arg1: i32) -> (i32, i32) {
    %c0_i32 = arith.constant 0 : i32
    %c0_i32_0 = arith.constant 0 : i32
    %c0_i32_1 = arith.constant 0 : i32
    return %c0_i32, %c0_i32_0 : i32, i32
  }
  func.func @transform_8(%arg0: i32, %arg1: i32) -> (i32, i32) {
    %c0_i32 = arith.constant 0 : i32
    %c0_i32_0 = arith.constant 0 : i32
    %c0_i32_1 = arith.constant 0 : i32
    return %c0_i32, %c0_i32_0 : i32, i32
  }
  func.func @transform_9(%arg0: i32, %arg1: i32) -> (i32, i32) {
    %c0_i32 = arith.constant 0 : i32
    %c0_i32_0 = arith.constant 0 : i32
    %c0_i32_1 = arith.constant 0 : i32
    return %c0_i32, %c0_i32_0 : i32, i32
  }
  func.func @transform_10(%arg0: i32, %arg1: i32) -> (i32, i32) {
    %c0_i32 = arith.constant 0 : i32
    %c0_i32_0 = arith.constant 0 : i32
    %c0_i32_1 = arith.constant 0 : i32
    return %c0_i32, %c0_i32_0 : i32, i32
  }
  func.func @transform_11(%arg0: i32, %arg1: i32) -> (i32, i32) {
    %c0_i32 = arith.constant 0 : i32
    %c0_i32_0 = arith.constant 0 : i32
    %c0_i32_1 = arith.constant 0 : i32
    return %c0_i32, %c0_i32_0 : i32, i32
  }
  func.func @transform_12(%arg0: i32, %arg1: i32) -> (i32, i32) {
    %c0_i32 = arith.constant 0 : i32
    %c0_i32_0 = arith.constant 0 : i32
    %c0_i32_1 = arith.constant 0 : i32
    return %c0_i32, %c0_i32_0 : i32, i32
  }
  func.func @transform_13(%arg0: i32, %arg1: i32) -> (i32, i32, i32) {
    %c0_i32 = arith.constant 0 : i32
    %c0_i32_0 = arith.constant 0 : i32
    return %arg0, %arg1, %c0_i32 : i32, i32, i32
  }
}

</mosaic_0001>

<llo_original>
// kernel: tpu_custom_call.1
$region0: #{tpu_custom_call.1}
  #allocation0 [shape = 'u32[]', space=smem, size = 0x4, offset = 0x4, fixed_abs, tag = 'smem constant byte address 0x4 - core index']
  #allocation1 [shape = 'u32[144,128]{1,0:T(1,128)}', space=vmem, size = 0x12000, scoped, tag = 'internal scratch']
  %s0 = inlined_call_operand.vmem [shape: f32[2,4,8,4], index: 0, kind: input, shape index: {}]
  %s1 = inlined_call_operand.vmem [shape: f32[2,4,32], index: 1, kind: input, shape index: {}]
  %s2 = inlined_call_operand.vmem [shape: f32[2,1,32], index: 2, kind: input, shape index: {}]
  %s3 = inlined_call_operand.vmem [shape: f32[2,32,16], index: 3, kind: input, shape index: {}]
  %s4 = inlined_call_operand.vmem [shape: f32[2,1,16], index: 4, kind: input, shape index: {}]
  %s5 = inlined_call_operand.vmem [shape: f32[2,16,16], index: 5, kind: input, shape index: {}]
  %s6 = inlined_call_operand.vmem [shape: f32[2,1,16], index: 6, kind: input, shape index: {}]
  %s7 = inlined_call_operand.vmem [shape: f32[2,4], index: 7, kind: input, shape index: {}]
  %s8 = inlined_call_operand.vmem [shape: f32[2,4], index: 8, kind: input, shape index: {}]
  %s9 = inlined_call_operand.vmem [shape: f32[2,16], index: 9, kind: input, shape index: {}]
  %s10 = inlined_call_operand.vmem [shape: f32[2,4], index: 10, kind: input, shape index: {}]
  %s11 = inlined_call_operand.vmem [shape: f32[2,4], index: 11, kind: input, shape index: {}]
  %s12 = inlined_call_operand.vmem [shape: f32[2,1], index: 12, kind: input, shape index: {}]
  %s13 = inlined_call_operand.hbm [shape: f32[2,8,16], index: 13, kind: output, shape index: {}]
  %s14 = sld [smem:[#allocation0]]
  $region109: #{tpu_custom_call.1} parent=0
    _
  %s16 = ssub.s32 1, %s14
  %s17 = scalar_select 0, %s16, %s14
  $region1: #{tpu_custom_call.1} parent=0
    #allocation2 [shape = 'u8[1024]{0}', space=smem, size = 0x400, scoped, tag = 'input window, operand 7, single buffered']
    #allocation3 [shape = 's32[2]{0}', space=sflag, size = 0x8, scoped, tag = 'scoped memory for tpu_custom_call.1']
    #allocation4 [shape = 's32[2]{0}', space=sflag, size = 0x8, scoped, tag = 'scoped memory for tpu_custom_call.1']
    #allocation5 [shape = 'u8[1024]{0}', space=smem, size = 0x400, scoped, tag = 'input window, operand 8, single buffered']
    #allocation6 [shape = 's32[1]{0}', space=sflag, size = 0x4, scoped, tag = 'scoped memory for tpu_custom_call.1']
    #allocation7 [shape = 'u8[1024]{0}', space=smem, size = 0x400, scoped, tag = 'input window, operand 9, single buffered']
    #allocation8 [shape = 'u8[1024]{0}', space=smem, size = 0x400, scoped, tag = 'input window, operand 10, single buffered']
    #allocation9 [shape = 's32[1]{0}', space=sflag, size = 0x4, scoped, tag = 'scoped memory for tpu_custom_call.1']
    #allocation10 [shape = 'u8[1024]{0}', space=smem, size = 0x400, scoped, tag = 'input window, operand 11, single buffered']
    #allocation11 [shape = 'u8[1024]{0}', space=smem, size = 0x400, scoped, tag = 'input window, operand 12, single buffered']
    #allocation12 [shape = 's32[1]{0}', space=sflag, size = 0x4, scoped, tag = 'scoped memory for tpu_custom_call.1']
    #allocation13 [shape = 'u8[8192]{0}', space=vmem, size = 0x2000, scoped, tag = 'output window, operand 0']
    %18 = vsyncpa [#allocation4], 0
    %19 = vsyncpa [#allocation6], 0
    %20 = vsyncpa [#allocation9], 0
    %21 = vsyncpa [#allocation12], 0
    %22 = vsyncpa [#allocation3], 0
    %s23 = scalar_lea.sflag [#allocation3], 1
    %24 = vsyncpa %s23, 0
    loop: start=0, step=1, limit=4
    $region2: #{tpu_custom_call.1} parent=1 // loop_pre_header
      _
    $region3: #{tpu_custom_call.1} parent=1 // loop_header
      %s26 = sphi 0, %s30
      %p27 = scmp.ge.s32.totalorder %s26, 4
      %s33 = sphi 0, %s45
      %s34 = sphi 0, %s41
      %s35 = sphi 0, %s33
      %s36 = sphi 0, %s34
      %s37 = sphi 0, %s35
      %s38 = sphi 0, %s36
      %s50 = sphi 0, %s52
      %s53 = sphi 0, %s50
      %s54 = sphi 0, %s53
      %s70 = sphi 0, %s54
      %s76 = sphi 0, %s78
      %s79 = sphi 0, %s76
      %s80 = sphi 0, %s79
      %s96 = sphi 0, %s80
      %s102 = sphi 0, %s104
      %s105 = sphi 0, %s102
      %s106 = sphi 0, %s105
      %s122 = sphi 0, %s106
      %s128 = sphi 0, %s130
      %s131 = sphi 0, %s128
      %s132 = sphi 0, %s131
      %s148 = sphi 0, %s132
      %s154 = sphi 0, %s156
      %s157 = sphi 0, %s154
      %s158 = sphi 0, %s157
      %s174 = sphi 0, %s158
      %s180 = sphi 0, %s182
      %s183 = sphi 0, %s180
      %s184 = sphi 0, %s183
      %s200 = sphi 0, %s184
      %s206 = sphi 0, %s208
      %s209 = sphi 0, %s206
      %s210 = sphi 0, %s209
      %s226 = sphi 0, %s210
      %s230 = sphi 0, %s230
      %s232 = sphi 0, %s230
      %s233 = sphi 0, %s232
      %s247 = sphi 0, %s233
      %s251 = sphi 0, %s251
      %s253 = sphi 0, %s251
      %s254 = sphi 0, %s253
      %s268 = sphi 0, %s254
      %s272 = sphi 0, %s272
      %s274 = sphi 0, %s272
      %s275 = sphi 0, %s274
      %s289 = sphi 0, %s275
      %s293 = sphi 0, %s293
      %s295 = sphi 0, %s293
      %s296 = sphi 0, %s295
      %s310 = sphi 0, %s296
      %s314 = sphi 0, %s314
      %s316 = sphi 0, %s314
      %s317 = sphi 0, %s316
      %s331 = sphi 0, %s317
      %s335 = sphi 0, %s335
      %s337 = sphi 0, %s335
      %s338 = sphi 0, %s337
      %s352 = sphi 0, %s338
      %s360 = sphi 0, %s362
      %s363 = sphi 0, %s360
      %s364 = sphi 0, %s363
      %s380 = sphi 0, %s364
    $region4: #{tpu_custom_call.1} parent=1 // loop_header_branch
      %29 = sbr.rel (%p27) target = $region8
    $region5: #{tpu_custom_call.1} parent=1 // loop_body
      %s31 = ssub.s32 %s26, 1
      %s32 = ssub.s32 %s26, 2
      %s39 = sadd.s32 1, %s34
      %p40 = scmp.ge.s32.totalorder %s39, 1
      %s41 = scalar_select %p40, 0, %s39
      %s42 = sadd.s32 1, %s33
      %s43 = scalar_select %p40, %s42, %s33
      %p44 = scmp.ge.s32.totalorder %s43, 2
      %s45 = scalar_select %p44, 0, %s43
      %s46 = ssub.s32 %s33, %s45
      %s47 = ssub.s32 %s34, %s41
      %s48 = sor.u32 %s46, %s47
      %p49 = scmp.eq.s32.totalorder %s48, 0
      %s51 = sadd.s32 %s50, 1
      %s52 = scalar_select %p49, %s50, %s51
      %p55 = pneg %p49
      %p56 = scmp.eq.s32.totalorder %s26, 1
      %p57 = por %p55, %p56
      %p58 = scmp.ne.s32.totalorder %s50, %s53
      %p59 = scmp.eq.s32.totalorder %s26, 0
      %p60 = por %p58, %p59
      %p61 = scmp.ne.s32.totalorder %s50, %s53
      %p62 = scmp.eq.s32.totalorder %s31, 1
      %p63 = por %p61, %p62
      %p64 = scmp.ne.s32.totalorder %s53, %s54
      %p65 = scmp.eq.s32.totalorder %s31, 0
      %p66 = por %p64, %p65
      %p67 = scmp.ne.s32.totalorder %s53, %s54
      %p68 = scmp.eq.s32.totalorder %s32, 1
      %p69 = por %p67, %p68
      %p71 = scmp.ne.s32.totalorder %s54, %s70
      %p72 = scmp.eq.s32.totalorder %s32, 0
      %p73 = por %p71, %p72
      %s74 = ssub.s32 %s33, %s45
      %p75 = scmp.eq.s32.totalorder %s74, 0
      %s77 = sadd.s32 %s76, 1
      %s78 = scalar_select %p75, %s76, %s77
      %p81 = pneg %p75
      %p82 = scmp.eq.s32.totalorder %s26, 1
      %p83 = por %p81, %p82
      %p84 = scmp.ne.s32.totalorder %s76, %s79
      %p85 = scmp.eq.s32.totalorder %s26, 0
      %p86 = por %p84, %p85
      %p87 = scmp.ne.s32.totalorder %s76, %s79
      %p88 = scmp.eq.s32.totalorder %s31, 1
      %p89 = por %p87, %p88
      %p90 = scmp.ne.s32.totalorder %s79, %s80
      %p91 = scmp.eq.s32.totalorder %s31, 0
      %p92 = por %p90, %p91
      %p93 = scmp.ne.s32.totalorder %s79, %s80
      %p94 = scmp.eq.s32.totalorder %s32, 1
      %p95 = por %p93, %p94
      %p97 = scmp.ne.s32.totalorder %s80, %s96
      %p98 = scmp.eq.s32.totalorder %s32, 0
      %p99 = por %p97, %p98
      %s100 = ssub.s32 %s33, %s45
      %p101 = scmp.eq.s32.totalorder %s100, 0
      %s103 = sadd.s32 %s102, 1
      %s104 = scalar_select %p101, %s102, %s103
      %p107 = pneg %p101
      %p108 = scmp.eq.s32.totalorder %s26, 1
      %p109 = por %p107, %p108
      %p110 = scmp.ne.s32.totalorder %s102, %s105
      %p111 = scmp.eq.s32.totalorder %s26, 0
      %p112 = por %p110, %p111
      %p113 = scmp.ne.s32.totalorder %s102, %s105
      %p114 = scmp.eq.s32.totalorder %s31, 1
      %p115 = por %p113, %p114
      %p116 = scmp.ne.s32.totalorder %s105, %s106
      %p117 = scmp.eq.s32.totalorder %s31, 0
      %p118 = por %p116, %p117
      %p119 = scmp.ne.s32.totalorder %s105, %s106
      %p120 = scmp.eq.s32.totalorder %s32, 1
      %p121 = por %p119, %p120
      %p123 = scmp.ne.s32.totalorder %s106, %s122
      %p124 = scmp.eq.s32.totalorder %s32, 0
      %p125 = por %p123, %p124
      %s126 = ssub.s32 %s33, %s45
      %p127 = scmp.eq.s32.totalorder %s126, 0
      %s129 = sadd.s32 %s128, 1
      %s130 = scalar_select %p127, %s128, %s129
      %p133 = pneg %p127
      %p134 = scmp.eq.s32.totalorder %s26, 1
      %p135 = por %p133, %p134
      %p136 = scmp.ne.s32.totalorder %s128, %s131
      %p137 = scmp.eq.s32.totalorder %s26, 0
      %p138 = por %p136, %p137
      %p139 = scmp.ne.s32.totalorder %s128, %s131
      %p140 = scmp.eq.s32.totalorder %s31, 1
      %p141 = por %p139, %p140
      %p142 = scmp.ne.s32.totalorder %s131, %s132
      %p143 = scmp.eq.s32.totalorder %s31, 0
      %p144 = por %p142, %p143
      %p145 = scmp.ne.s32.totalorder %s131, %s132
      %p146 = scmp.eq.s32.totalorder %s32, 1
      %p147 = por %p145, %p146
      %p149 = scmp.ne.s32.totalorder %s132, %s148
      %p150 = scmp.eq.s32.totalorder %s32, 0
      %p151 = por %p149, %p150
      %s152 = ssub.s32 %s33, %s45
      %p153 = scmp.eq.s32.totalorder %s152, 0
      %s155 = sadd.s32 %s154, 1
      %s156 = scalar_select %p153, %s154, %s155
      %p159 = pneg %p153
      %p160 = scmp.eq.s32.totalorder %s26, 1
      %p161 = por %p159, %p160
      %p162 = scmp.ne.s32.totalorder %s154, %s157
      %p163 = scmp.eq.s32.totalorder %s26, 0
      %p164 = por %p162, %p163
      %p165 = scmp.ne.s32.totalorder %s154, %s157
      %p166 = scmp.eq.s32.totalorder %s31, 1
      %p167 = por %p165, %p166
      %p168 = scmp.ne.s32.totalorder %s157, %s158
      %p169 = scmp.eq.s32.totalorder %s31, 0
      %p170 = por %p168, %p169
      %p171 = scmp.ne.s32.totalorder %s157, %s158
      %p172 = scmp.eq.s32.totalorder %s32, 1
      %p173 = por %p171, %p172
      %p175 = scmp.ne.s32.totalorder %s158, %s174
      %p176 = scmp.eq.s32.totalorder %s32, 0
      %p177 = por %p175, %p176
      %s178 = ssub.s32 %s33, %s45
      %p179 = scmp.eq.s32.totalorder %s178, 0
      %s181 = sadd.s32 %s180, 1
      %s182 = scalar_select %p179, %s180, %s181
      %p185 = pneg %p179
      %p186 = scmp.eq.s32.totalorder %s26, 1
      %p187 = por %p185, %p186
      %p188 = scmp.ne.s32.totalorder %s180, %s183
      %p189 = scmp.eq.s32.totalorder %s26, 0
      %p190 = por %p188, %p189
      %p191 = scmp.ne.s32.totalorder %s180, %s183
      %p192 = scmp.eq.s32.totalorder %s31, 1
      %p193 = por %p191, %p192
      %p194 = scmp.ne.s32.totalorder %s183, %s184
      %p195 = scmp.eq.s32.totalorder %s31, 0
      %p196 = por %p194, %p195
      %p197 = scmp.ne.s32.totalorder %s183, %s184
      %p198 = scmp.eq.s32.totalorder %s32, 1
      %p199 = por %p197, %p198
      %p201 = scmp.ne.s32.totalorder %s184, %s200
      %p202 = scmp.eq.s32.totalorder %s32, 0
      %p203 = por %p201, %p202
      %s204 = ssub.s32 %s33, %s45
      %p205 = scmp.eq.s32.totalorder %s204, 0
      %s207 = sadd.s32 %s206, 1
      %s208 = scalar_select %p205, %s206, %s207
      %p211 = pneg %p205
      %p212 = scmp.eq.s32.totalorder %s26, 1
      %p213 = por %p211, %p212
      %p214 = scmp.ne.s32.totalorder %s206, %s209
      %p215 = scmp.eq.s32.totalorder %s26, 0
      %p216 = por %p214, %p215
      %p217 = scmp.ne.s32.totalorder %s206, %s209
      %p218 = scmp.eq.s32.totalorder %s31, 1
      %p219 = por %p217, %p218
      %p220 = scmp.ne.s32.totalorder %s209, %s210
      %p221 = scmp.eq.s32.totalorder %s31, 0
      %p222 = por %p220, %p221
      %p223 = scmp.ne.s32.totalorder %s209, %s210
      %p224 = scmp.eq.s32.totalorder %s32, 1
      %p225 = por %p223, %p224
      %p227 = scmp.ne.s32.totalorder %s210, %s226
      %p228 = scmp.eq.s32.totalorder %s32, 0
      %p229 = por %p227, %p228
      %s231 = sadd.s32 %s230, 1
      %p234 = scmp.eq.s32.totalorder %s26, 1
      %p235 = scmp.ne.s32.totalorder %s230, %s232
      %p236 = scmp.eq.s32.totalorder %s26, 0
      %p237 = por %p235, %p236
      %p238 = scmp.ne.s32.totalorder %s230, %s232
      %p239 = scmp.eq.s32.totalorder %s31, 1
      %p240 = por %p238, %p239
      %p241 = scmp.ne.s32.totalorder %s232, %s233
      %p242 = scmp.eq.s32.totalorder %s31, 0
      %p243 = por %p241, %p242
      %p244 = scmp.ne.s32.totalorder %s232, %s233
      %p245 = scmp.eq.s32.totalorder %s32, 1
      %p246 = por %p244, %p245
      %p248 = scmp.ne.s32.totalorder %s233, %s247
      %p249 = scmp.eq.s32.totalorder %s32, 0
      %p250 = por %p248, %p249
      %s252 = sadd.s32 %s251, 1
      %p255 = scmp.eq.s32.totalorder %s26, 1
      %p256 = scmp.ne.s32.totalorder %s251, %s253
      %p257 = scmp.eq.s32.totalorder %s26, 0
      %p258 = por %p256, %p257
      %p259 = scmp.ne.s32.totalorder %s251, %s253
      %p260 = scmp.eq.s32.totalorder %s31, 1
      %p261 = por %p259, %p260
      %p262 = scmp.ne.s32.totalorder %s253, %s254
      %p263 = scmp.eq.s32.totalorder %s31, 0
      %p264 = por %p262, %p263
      %p265 = scmp.ne.s32.totalorder %s253, %s254
      %p266 = scmp.eq.s32.totalorder %s32, 1
      %p267 = por %p265, %p266
      %p269 = scmp.ne.s32.totalorder %s254, %s268
      %p270 = scmp.eq.s32.totalorder %s32, 0
      %p271 = por %p269, %p270
      %s273 = sadd.s32 %s272, 1
      %p276 = scmp.eq.s32.totalorder %s26, 1
      %p277 = scmp.ne.s32.totalorder %s272, %s274
      %p278 = scmp.eq.s32.totalorder %s26, 0
      %p279 = por %p277, %p278
      %p280 = scmp.ne.s32.totalorder %s272, %s274
      %p281 = scmp.eq.s32.totalorder %s31, 1
      %p282 = por %p280, %p281
      %p283 = scmp.ne.s32.totalorder %s274, %s275
      %p284 = scmp.eq.s32.totalorder %s31, 0
      %p285 = por %p283, %p284
      %p286 = scmp.ne.s32.totalorder %s274, %s275
      %p287 = scmp.eq.s32.totalorder %s32, 1
      %p288 = por %p286, %p287
      %p290 = scmp.ne.s32.totalorder %s275, %s289
      %p291 = scmp.eq.s32.totalorder %s32, 0
      %p292 = por %p290, %p291
      %s294 = sadd.s32 %s293, 1
      %p297 = scmp.eq.s32.totalorder %s26, 1
      %p298 = scmp.ne.s32.totalorder %s293, %s295
      %p299 = scmp.eq.s32.totalorder %s26, 0
      %p300 = por %p298, %p299
      %p301 = scmp.ne.s32.totalorder %s293, %s295
      %p302 = scmp.eq.s32.totalorder %s31, 1
      %p303 = por %p301, %p302
      %p304 = scmp.ne.s32.totalorder %s295, %s296
      %p305 = scmp.eq.s32.totalorder %s31, 0
      %p306 = por %p304, %p305
      %p307 = scmp.ne.s32.totalorder %s295, %s296
      %p308 = scmp.eq.s32.totalorder %s32, 1
      %p309 = por %p307, %p308
      %p311 = scmp.ne.s32.totalorder %s296, %s310
      %p312 = scmp.eq.s32.totalorder %s32, 0
      %p313 = por %p311, %p312
      %s315 = sadd.s32 %s314, 1
      %p318 = scmp.eq.s32.totalorder %s26, 1
      %p319 = scmp.ne.s32.totalorder %s314, %s316
      %p320 = scmp.eq.s32.totalorder %s26, 0
      %p321 = por %p319, %p320
      %p322 = scmp.ne.s32.totalorder %s314, %s316
      %p323 = scmp.eq.s32.totalorder %s31, 1
      %p324 = por %p322, %p323
      %p325 = scmp.ne.s32.totalorder %s316, %s317
      %p326 = scmp.eq.s32.totalorder %s31, 0
      %p327 = por %p325, %p326
      %p328 = scmp.ne.s32.totalorder %s316, %s317
      %p329 = scmp.eq.s32.totalorder %s32, 1
      %p330 = por %p328, %p329
      %p332 = scmp.ne.s32.totalorder %s317, %s331
      %p333 = scmp.eq.s32.totalorder %s32, 0
      %p334 = por %p332, %p333
      %s336 = sadd.s32 %s335, 1
      %p339 = scmp.eq.s32.totalorder %s26, 1
      %p340 = scmp.ne.s32.totalorder %s335, %s337
      %p341 = scmp.eq.s32.totalorder %s26, 0
      %p342 = por %p340, %p341
      %p343 = scmp.ne.s32.totalorder %s335, %s337
      %p344 = scmp.eq.s32.totalorder %s31, 1
      %p345 = por %p343, %p344
      %p346 = scmp.ne.s32.totalorder %s337, %s338
      %p347 = scmp.eq.s32.totalorder %s31, 0
      %p348 = por %p346, %p347
      %p349 = scmp.ne.s32.totalorder %s337, %s338
      %p350 = scmp.eq.s32.totalorder %s32, 1
      %p351 = por %p349, %p350
      %p353 = scmp.ne.s32.totalorder %s338, %s352
      %p354 = scmp.eq.s32.totalorder %s32, 0
      %p355 = por %p353, %p354
      %s356 = ssub.s32 %s33, %s45
      %s357 = ssub.s32 %s34, %s41
      %s358 = sor.u32 %s356, %s357
      %p359 = scmp.eq.s32.totalorder %s358, 0
      %s361 = sadd.s32 %s360, 1
      %s362 = scalar_select %p359, %s360, %s361
      %p365 = pneg %p359
      %p366 = scmp.eq.s32.totalorder %s26, 1
      %p367 = por %p365, %p366
      %p368 = scmp.ne.s32.totalorder %s360, %s363
      %p369 = scmp.eq.s32.totalorder %s26, 0
      %p370 = por %p368, %p369
      %p371 = scmp.ne.s32.totalorder %s360, %s363
      %p372 = scmp.eq.s32.totalorder %s31, 1
      %p373 = por %p371, %p372
      %p374 = scmp.ne.s32.totalorder %s363, %s364
      %p375 = scmp.eq.s32.totalorder %s31, 0
      %p376 = por %p374, %p375
      %p377 = scmp.ne.s32.totalorder %s363, %s364
      %p378 = scmp.eq.s32.totalorder %s32, 1
      %p379 = por %p377, %p378
      %p381 = scmp.ne.s32.totalorder %s364, %s380
      %p382 = scmp.eq.s32.totalorder %s32, 0
      %p383 = por %p381, %p382
      %p384 = scmp.le.s32.totalorder 1, %s26
      %p385 = scmp.lt.s32.totalorder %s26, 3
      %p386 = pnand %p384, %p385
      %p387 = pneg %p386
      // Predicated region
      $region9: #{tpu_custom_call.1} parent=5 // pred_check
        _
      $region10: #{tpu_custom_call.1} parent=5 // pred_check_branch
        %389 = sbr.rel (%p386) target = $region12
      $region11: #{tpu_custom_call.1} parent=5 // pred_region
        %s390 = ssub.s32 %s26, 1
        // Predicated region
        $region13: #{tpu_custom_call.1} parent=11 // pred_check
          %p391 = pneg %p243
        $region14: #{tpu_custom_call.1} parent=11 // pred_check_branch
          %393 = sbr.rel (%p391) target = $region16
        $region15: #{tpu_custom_call.1} parent=11 // pred_region
          %s395 = ssub.s32 32, 32
          %396 = vsyncadd [#allocation4], %s395
          %s398 = sshll.u32 %s7, 4
          %s399 = int_to_ptr.vmem [resolvable:$true] %s398
          %401 = dma.vmem_to_smem %s399, 32, [#allocation2], [#allocation4]
        $region16: #{tpu_custom_call.1} parent=11 // pred_fallthru
          _
        // Predicated region
        $region17: #{tpu_custom_call.1} parent=11 // pred_check
          %p402 = pneg %p264
        $region18: #{tpu_custom_call.1} parent=11 // pred_check_branch
          %404 = sbr.rel (%p402) target = $region20
        $region19: #{tpu_custom_call.1} parent=11 // pred_region
          %s406 = ssub.s32 32, 32
          %407 = vsyncadd [#allocation6], %s406
          %s409 = sshll.u32 %s8, 4
          %s410 = int_to_ptr.vmem [resolvable:$true] %s409
          %412 = dma.vmem_to_smem %s410, 32, [#allocation5], [#allocation6]
        $region20: #{tpu_custom_call.1} parent=11 // pred_fallthru
          _
        // Predicated region
        $region21: #{tpu_custom_call.1} parent=11 // pred_check
          %p413 = pneg %p285
        $region22: #{tpu_custom_call.1} parent=11 // pred_check_branch
          %415 = sbr.rel (%p413) target = $region24
        $region23: #{tpu_custom_call.1} parent=11 // pred_region
          %s417 = ssub.s32 32, 32
          %418 = vsyncadd [#allocation6], %s417
          %s420 = sshll.u32 %s9, 4
          %s421 = int_to_ptr.vmem [resolvable:$true] %s420
          %423 = dma.vmem_to_smem %s421, 32, [#allocation7], [#allocation6]
        $region24: #{tpu_custom_call.1} parent=11 // pred_fallthru
          _
        // Predicated region
        $region25: #{tpu_custom_call.1} parent=11 // pred_check
          %p424 = pneg %p306
        $region26: #{tpu_custom_call.1} parent=11 // pred_check_branch
          %426 = sbr.rel (%p424) target = $region28
        $region27: #{tpu_custom_call.1} parent=11 // pred_region
          %s428 = ssub.s32 32, 32
          %429 = vsyncadd [#allocation9], %s428
          %s431 = sshll.u32 %s10, 4
          %s432 = int_to_ptr.vmem [resolvable:$true] %s431
          %434 = dma.vmem_to_smem %s432, 32, [#allocation8], [#allocation9]
        $region28: #{tpu_custom_call.1} parent=11 // pred_fallthru
          _
        // Predicated region
        $region29: #{tpu_custom_call.1} parent=11 // pred_check
          %p435 = pneg %p327
        $region30: #{tpu_custom_call.1} parent=11 // pred_check_branch
          %437 = sbr.rel (%p435) target = $region32
        $region31: #{tpu_custom_call.1} parent=11 // pred_region
          %s439 = ssub.s32 32, 32
          %440 = vsyncadd [#allocation9], %s439
          %s442 = sshll.u32 %s11, 4
          %s443 = int_to_ptr.vmem [resolvable:$true] %s442
          %445 = dma.vmem_to_smem %s443, 32, [#allocation10], [#allocation9]
        $region32: #{tpu_custom_call.1} parent=11 // pred_fallthru
          _
        // Predicated region
        $region33: #{tpu_custom_call.1} parent=11 // pred_check
          %p446 = pneg %p348
        $region34: #{tpu_custom_call.1} parent=11 // pred_check_branch
          %448 = sbr.rel (%p446) target = $region36
        $region35: #{tpu_custom_call.1} parent=11 // pred_region
          %s450 = ssub.s32 32, 32
          %451 = vsyncadd [#allocation12], %s450
          %s453 = sshll.u32 %s12, 4
          %s454 = int_to_ptr.vmem [resolvable:$true] %s453
          %456 = dma.vmem_to_smem %s454, 32, [#allocation11], [#allocation12]
        $region36: #{tpu_custom_call.1} parent=11 // pred_fallthru
          _
      $region12: #{tpu_custom_call.1} parent=5 // pred_fallthru
        _
      %p457 = scmp.lt.s32.totalorder %s26, 2
      // Predicated region
      $region37: #{tpu_custom_call.1} parent=5 // pred_check
        %p458 = pneg %p457
      $region38: #{tpu_custom_call.1} parent=5 // pred_check_branch
        %460 = sbr.rel (%p458) target = $region40
      $region39: #{tpu_custom_call.1} parent=5 // pred_region
        // Predicated region
        $region41: #{tpu_custom_call.1} parent=39 // pred_check
          %p461 = pneg %p60
        $region42: #{tpu_custom_call.1} parent=39 // pred_check_branch
          %463 = sbr.rel (%p461) target = $region44
        $region43: #{tpu_custom_call.1} parent=39 // pred_region
          %p464 = scmp.lt.s32.totalorder %s33, 1
          %s465 = scalar_select %p464, %s33, 1
          %p466 = scmp.lt.s32.totalorder %s34, 0
          %s467 = scalar_select %p466, %s34, 0
          %s468 = smul.addr %s465, 4
          %s469 = sadd.s32 %s467, %s468
          %s470 = smul.addr %s469, 8
          %s471 = scalar_lea.vmem %s0, %s470
        $region44: #{tpu_custom_call.1} parent=39 // pred_fallthru
          _
        // Predicated region
        $region45: #{tpu_custom_call.1} parent=39 // pred_check
          %p472 = pneg %p86
        $region46: #{tpu_custom_call.1} parent=39 // pred_check_branch
          %474 = sbr.rel (%p472) target = $region48
        $region47: #{tpu_custom_call.1} parent=39 // pred_region
          %p475 = scmp.lt.s32.totalorder %s33, 1
          %s476 = scalar_select %p475, %s33, 1
          %s477 = smul.addr %s476, 4
          %s478 = scalar_lea.vmem %s1, %s477
        $region48: #{tpu_custom_call.1} parent=39 // pred_fallthru
          _
        // Predicated region
        $region49: #{tpu_custom_call.1} parent=39 // pred_check
          %p479 = pneg %p112
        $region50: #{tpu_custom_call.1} parent=39 // pred_check_branch
          %481 = sbr.rel (%p479) target = $region52
        $region51: #{tpu_custom_call.1} parent=39 // pred_region
          %p482 = scmp.lt.s32.totalorder %s33, 1
          %s483 = scalar_select %p482, %s33, 1
          %s484 = scalar_lea.vmem %s2, %s483
        $region52: #{tpu_custom_call.1} parent=39 // pred_fallthru
          _
        // Predicated region
        $region53: #{tpu_custom_call.1} parent=39 // pred_check
          %p485 = pneg %p138
        $region54: #{tpu_custom_call.1} parent=39 // pred_check_branch
          %487 = sbr.rel (%p485) target = $region56
        $region55: #{tpu_custom_call.1} parent=39 // pred_region
          %p488 = scmp.lt.s32.totalorder %s33, 1
          %s489 = scalar_select %p488, %s33, 1
          %s490 = smul.addr %s489, 4
          %s491 = smul.addr %s490, 8
          %s492 = scalar_lea.vmem %s3, %s491
        $region56: #{tpu_custom_call.1} parent=39 // pred_fallthru
          _
        // Predicated region
        $region57: #{tpu_custom_call.1} parent=39 // pred_check
          %p493 = pneg %p164
        $region58: #{tpu_custom_call.1} parent=39 // pred_check_branch
          %495 = sbr.rel (%p493) target = $region60
        $region59: #{tpu_custom_call.1} parent=39 // pred_region
          %p496 = scmp.lt.s32.totalorder %s33, 1
          %s497 = scalar_select %p496, %s33, 1
          %s498 = scalar_lea.vmem %s4, %s497
        $region60: #{tpu_custom_call.1} parent=39 // pred_fallthru
          _
        // Predicated region
        $region61: #{tpu_custom_call.1} parent=39 // pred_check
          %p499 = pneg %p190
        $region62: #{tpu_custom_call.1} parent=39 // pred_check_branch
          %501 = sbr.rel (%p499) target = $region64
        $region63: #{tpu_custom_call.1} parent=39 // pred_region
          %p502 = scmp.lt.s32.totalorder %s33, 1
          %s503 = scalar_select %p502, %s33, 1
          %s504 = smul.addr %s503, 2
          %s505 = smul.addr %s504, 8
          %s506 = scalar_lea.vmem %s5, %s505
        $region64: #{tpu_custom_call.1} parent=39 // pred_fallthru
          _
        // Predicated region
        $region65: #{tpu_custom_call.1} parent=39 // pred_check
          %p507 = pneg %p216
        $region66: #{tpu_custom_call.1} parent=39 // pred_check_branch
          %509 = sbr.rel (%p507) target = $region68
        $region67: #{tpu_custom_call.1} parent=39 // pred_region
          %p510 = scmp.lt.s32.totalorder %s33, 1
          %s511 = scalar_select %p510, %s33, 1
          %s512 = scalar_lea.vmem %s6, %s511
        $region68: #{tpu_custom_call.1} parent=39 // pred_fallthru
          _
      $region40: #{tpu_custom_call.1} parent=5 // pred_fallthru
        _
      %p513 = scmp.le.s32.totalorder 1, %s26
      %p514 = scmp.lt.s32.totalorder %s26, 3
      %p515 = pnand %p513, %p514
      %p516 = pneg %p515
      // Predicated region
      $region69: #{tpu_custom_call.1} parent=5 // pred_check
        _
      $region70: #{tpu_custom_call.1} parent=5 // pred_check_branch
        %518 = sbr.rel (%p515) target = $region72
      $region71: #{tpu_custom_call.1} parent=5 // pred_region
        %s519 = ssub.s32 %s26, 1
        // Predicated region
        $region73: #{tpu_custom_call.1} parent=71 // pred_check
          %p520 = pneg %p243
        $region74: #{tpu_custom_call.1} parent=71 // pred_check_branch
          %522 = sbr.rel (%p520) target = $region76
        $region75: #{tpu_custom_call.1} parent=71 // pred_region
          %523 = dma.done [#allocation4], 32
        $region76: #{tpu_custom_call.1} parent=71 // pred_fallthru
          _
        // Predicated region
        $region77: #{tpu_custom_call.1} parent=71 // pred_check
          %p524 = pneg %p264
        $region78: #{tpu_custom_call.1} parent=71 // pred_check_branch
          %526 = sbr.rel (%p524) target = $region80
        $region79: #{tpu_custom_call.1} parent=71 // pred_region
          %527 = dma.done [#allocation6], 32
        $region80: #{tpu_custom_call.1} parent=71 // pred_fallthru
          _
        // Predicated region
        $region81: #{tpu_custom_call.1} parent=71 // pred_check
          %p528 = pneg %p285
        $region82: #{tpu_custom_call.1} parent=71 // pred_check_branch
          %530 = sbr.rel (%p528) target = $region84
        $region83: #{tpu_custom_call.1} parent=71 // pred_region
          %531 = dma.done [#allocation6], 32
        $region84: #{tpu_custom_call.1} parent=71 // pred_fallthru
          _
        // Predicated region
        $region85: #{tpu_custom_call.1} parent=71 // pred_check
          %p532 = pneg %p306
        $region86: #{tpu_custom_call.1} parent=71 // pred_check_branch
          %534 = sbr.rel (%p532) target = $region88
        $region87: #{tpu_custom_call.1} parent=71 // pred_region
          %535 = dma.done [#allocation9], 32
        $region88: #{tpu_custom_call.1} parent=71 // pred_fallthru
          _
        // Predicated region
        $region89: #{tpu_custom_call.1} parent=71 // pred_check
          %p536 = pneg %p327
        $region90: #{tpu_custom_call.1} parent=71 // pred_check_branch
          %538 = sbr.rel (%p536) target = $region92
        $region91: #{tpu_custom_call.1} parent=71 // pred_region
          %539 = dma.done [#allocation9], 32
        $region92: #{tpu_custom_call.1} parent=71 // pred_fallthru
          _
        // Predicated region
        $region93: #{tpu_custom_call.1} parent=71 // pred_check
          %p540 = pneg %p348
        $region94: #{tpu_custom_call.1} parent=71 // pred_check_branch
          %542 = sbr.rel (%p540) target = $region96
        $region95: #{tpu_custom_call.1} parent=71 // pred_region
          %543 = dma.done [#allocation12], 32
        $region96: #{tpu_custom_call.1} parent=71 // pred_fallthru
          _
        %544 = sfence
        %p545 = scmp.lt.s32.totalorder %s35, 1
        %s546 = scalar_select %p545, %s35, 1
        %p547 = scmp.lt.s32.totalorder %s36, 0
        %s548 = scalar_select %p547, %s36, 0
        %s549 = smul.addr %s546, 4
        %s550 = sadd.s32 %s548, %s549
        %s551 = smul.addr %s550, 8
        %s552 = scalar_lea.vmem %s0, %s551
        %p553 = pneg %p66
        %p554 = pneg %p63
        %p555 = scmp.lt.s32.totalorder %s35, 1
        %s556 = scalar_select %p555, %s35, 1
        %s557 = smul.addr %s556, 4
        %s558 = scalar_lea.vmem %s1, %s557
        %p559 = pneg %p92
        %p560 = pneg %p89
        %p561 = scmp.lt.s32.totalorder %s35, 1
        %s562 = scalar_select %p561, %s35, 1
        %s563 = scalar_lea.vmem %s2, %s562
        %p564 = pneg %p118
        %p565 = pneg %p115
        %p566 = scmp.lt.s32.totalorder %s35, 1
        %s567 = scalar_select %p566, %s35, 1
        %s568 = smul.addr %s567, 4
        %s569 = smul.addr %s568, 8
        %s570 = scalar_lea.vmem %s3, %s569
        %p571 = pneg %p144
        %p572 = pneg %p141
        %p573 = scmp.lt.s32.totalorder %s35, 1
        %s574 = scalar_select %p573, %s35, 1
        %s575 = scalar_lea.vmem %s4, %s574
        %p576 = pneg %p170
        %p577 = pneg %p167
        %p578 = scmp.lt.s32.totalorder %s35, 1
        %s579 = scalar_select %p578, %s35, 1
        %s580 = smul.addr %s579, 2
        %s581 = smul.addr %s580, 8
        %s582 = scalar_lea.vmem %s5, %s581
        %p583 = pneg %p196
        %p584 = pneg %p193
        %p585 = scmp.lt.s32.totalorder %s35, 1
        %s586 = scalar_select %p585, %s35, 1
        %s587 = scalar_lea.vmem %s6, %s586
        %p588 = pneg %p222
        %p589 = pneg %p219
        %p590 = pneg %p243
        %p591 = pneg %p240
        %p592 = pneg %p264
        %p593 = pneg %p261
        %p594 = pneg %p285
        %p595 = pneg %p282
        %p596 = pneg %p306
        %p597 = pneg %p303
        %p598 = pneg %p327
        %p599 = pneg %p324
        %p600 = pneg %p348
        %p601 = pneg %p345
        %p602 = pneg %p376
        %p603 = pneg %p373
        %s604 = sand.u32 %s363, 1
        %s605 = scalar_lea.sflag [#allocation3], %s604
        %s606 = sand.u32 %s363, 1
        %s607 = smul.addr %s606, 8
        %s608 = scalar_lea.vmem [#allocation13], %s607
        %p609 = scmp.lt.s32.totalorder %s35, 1
        %s610 = scalar_select %p609, %s35, 1
        %p611 = scmp.lt.s32.totalorder %s36, 0
        %s612 = scalar_select %p611, %s36, 0
        %s613 = smul.addr %s610, 4
        %s614 = sadd.s32 %s612, %s613
        %s615 = smul.addr %s614, 8
        %s616 = scalar_lea.vmem %s0, %s615
        %p617 = scmp.lt.s32.totalorder %s35, 1
        %s618 = scalar_select %p617, %s35, 1
        %s619 = smul.addr %s618, 4
        %s620 = scalar_lea.vmem %s1, %s619
        %p621 = scmp.lt.s32.totalorder %s35, 1
        %s622 = scalar_select %p621, %s35, 1
        %s623 = scalar_lea.vmem %s2, %s622
        %p624 = scmp.lt.s32.totalorder %s35, 1
        %s625 = scalar_select %p624, %s35, 1
        %s626 = smul.addr %s625, 4
        %s627 = smul.addr %s626, 8
        %s628 = scalar_lea.vmem %s3, %s627
        %p629 = scmp.lt.s32.totalorder %s35, 1
        %s630 = scalar_select %p629, %s35, 1
        %s631 = scalar_lea.vmem %s4, %s630
        %p632 = scmp.lt.s32.totalorder %s35, 1
        %s633 = scalar_select %p632, %s35, 1
        %s634 = smul.addr %s633, 2
        %s635 = smul.addr %s634, 8
        %s636 = scalar_lea.vmem %s5, %s635
        %p637 = scmp.lt.s32.totalorder %s35, 1
        %s638 = scalar_select %p637, %s35, 1
        %s639 = scalar_lea.vmem %s6, %s638
        %v640 = vld [vmem:[%s620] sm:$0xf]
        %v641 = vld [vmem:[%s623] sm:$0x1]
        %v642 = vld [vmem:[%s628] sm:$0xff]
        %v643 = vld [vmem:[%s628 + $0x8] sm:$0xff]
        %v644 = vld [vmem:[%s628 + $0x10] sm:$0xff]
        %v645 = vld [vmem:[%s628 + $0x18] sm:$0xff]
        %v646 = vld [vmem:[%s631] sm:$0x1]
        %v647 = vld [vmem:[%s636] sm:$0xff]
        %v648 = vld [vmem:[%s636 + $0x8] sm:$0xff]
        %v649 = vld [vmem:[%s639] sm:$0x1]
        %v650 = vld [vmem:[%s616] sm:$0xff]
        %vm651 = vcmask 31744
        %v652 = vsel %vm651, %v650, 0.0
        %653 = vadd.xlane.f32.xlu0 %v652
        %v654 = vpop.xlane.xlu0 %653
        %v655 = vrcp.pop 4.0
        %v656 = vmul.f32 %v654, %v655
        %v657 = vsub.f32 %v650, %v656
        %v658 = vmul.f32 %v657, %v657
        %v659 = vsel %vm651, %v658, 0.0
        %660 = vadd.xlane.f32.xlu0 %v659
        %v661 = vpop.xlane.xlu0 %660
        %v662 = vmul.f32 %v661, %v655
        %v663 = vadd.f32 %v662, 1e-05
        %v664 = vrsqrt.pop %v663
        %v665 = vmul.f32 %v663, %v664
        %v666 = vmul.f32 %v657, %v664
        %s667 = smul.u32 %s35, 128
        %s668 = sld [smem:[#allocation2 + %s667]]
        %v669 = vstv %s668
        %v670 = vmul.f32 %v666, %v669
        %s671 = sld [smem:[#allocation5 + %s667]]
        %v672 = vstv %s671
        %v673 = vadd.f32 %v670, %v672
        %v675 = vlaneseq
        %v676 = vshrl.u32 %v675, 7
        %v677 = vsub.s32 0, %v676
        %v678 = vrot.slane %v641, %v677
        %v681 = vsel %vm651, %v673, 0
        %vm683 = vcmask 1043456
        %v685 = vsel %vm683, %v640, 0
        %687 = vmatprep.subr.mxu0 0.0
        %688 = vmatpush1.msra.mxu0 %v685
        %689 = vmatprep.subr.mxu0 0.0
        %690 = vmatpush1.msra.mxu0 0.0
        %691 = vmatprep.subr.mxu0 0.0
        %692 = vmatpush1.msra.mxu0 0.0
        %693 = vmatprep.subr.mxu0 0.0
        %694 = vmatpush1.msra.mxu0 0.0
        %695 = vmatprep.subr.mxu0 0.0
        %696 = vmatpush1.msra.mxu0 0.0
        %697 = vmatprep.subr.mxu0 0.0
        %698 = vmatpush1.msra.mxu0 0.0
        %699 = vmatprep.subr.mxu0 0.0
        %700 = vmatpush1.msra.mxu0 0.0
        %701 = vmatprep.subr.mxu0 0.0
        %702 = vmatpush1.msra.mxu0 0.0
        %703 = vmatprep.subr.mxu0 0.0
        %704 = vmatpush1.msra.mxu0 0.0
        %705 = vmatprep.subr.mxu0 0.0
        %706 = vmatpush1.msra.mxu0 0.0
        %707 = vmatprep.subr.mxu0 0.0
        %708 = vmatpush1.msra.mxu0 0.0
        %709 = vmatprep.subr.mxu0 0.0
        %710 = vmatpush1.msra.mxu0 0.0
        %711 = vmatprep.subr.mxu0 0.0
        %712 = vmatpush1.msra.mxu0 0.0
        %713 = vmatprep.subr.mxu0 0.0
        %714 = vmatpush1.msra.mxu0 0.0
        %715 = vmatprep.subr.mxu0 0.0
        %716 = vmatpush1.msra.mxu0 0.0
        %717 = vmatprep.subr.mxu0 0.0
        %718 = vmatpush1.msra.mxu0 0.0
        %719 = vmatprep.subr.mxu0 0.0
        %720 = vmatpush1.msra.mxu0 0.0
        %721 = vmatprep.subr.mxu0 0.0
        %722 = vmatpush1.msra.mxu0 0.0
        %723 = vmatprep.subr.mxu0 0.0
        %724 = vmatpush1.msra.mxu0 0.0
        %725 = vmatprep.subr.mxu0 0.0
        %726 = vmatpush1.msra.mxu0 0.0
        %727 = vmatprep.subr.mxu0 0.0
        %728 = vmatpush1.msra.mxu0 0.0
        %729 = vmatprep.subr.mxu0 0.0
        %730 = vmatpush1.msra.mxu0 0.0
        %731 = vmatprep.subr.mxu0 0.0
        %732 = vmatpush1.msra.mxu0 0.0
        %733 = vmatprep.subr.mxu0 0.0
        %734 = vmatpush1.msra.mxu0 0.0
        %735 = vmatprep.subr.mxu0 0.0
        %736 = vmatpush1.msra.mxu0 0.0
        %737 = vmatprep.subr.mxu0 0.0
        %738 = vmatpush1.msra.mxu0 0.0
        %739 = vmatprep.subr.mxu0 0.0
        %740 = vmatpush1.msra.mxu0 0.0
        %741 = vmatprep.subr.mxu0 0.0
        %742 = vmatpush1.msra.mxu0 0.0
        %743 = vmatprep.subr.mxu0 0.0
        %744 = vmatpush1.msra.mxu0 0.0
        %745 = vmatprep.subr.mxu0 0.0
        %746 = vmatpush1.msra.mxu0 0.0
        %747 = vmatprep.subr.mxu0 0.0
        %748 = vmatpush1.msra.mxu0 0.0
        %749 = vmatprep.subr.mxu0 0.0
        %750 = vmatpush1.msra.mxu0 0.0
        %751 = vmatprep.mubr.f32.mxu0 0.0
        %752 = vmatmul.mubr.f32.gmra.mrb[0].mxu0 %v681
        %v753 = vpop.f32.mrb[0].mxu0
        %v754 = vadd.f32 %v678, %v753
        %v755 = vpop.f32.mrb[0].mxu0
        %756 = vdwg.mxu0
        %vm757 = vcmp.ge.f32.partialorder %v754, 0.0
        %v758 = vmul.f32 %v754, 0.01
        %v759 = vsel %vm757, %v754, %v758
        %v761 = vlaneseq
        %v762 = vshrl.u32 %v761, 7
        %v763 = vsub.s32 0, %v762
        %v764 = vrot.slane %v646, %v763
        %vm766 = vcmask 261120
        %v768 = vsel %vm766, %v759, 0
        %770 = vmatprep.subr.mxu0 0.0
        %771 = vmatpush1.msra.mxu0 %v642
        %772 = vmatprep.subr.mxu0 0.0
        %773 = vmatpush1.msra.mxu0 %v643
        %774 = vmatprep.subr.mxu0 0.0
        %775 = vmatpush1.msra.mxu0 %v644
        %776 = vmatprep.subr.mxu0 0.0
        %777 = vmatpush1.msra.mxu0 %v645
        %778 = vmatprep.subr.mxu0 0.0
        %779 = vmatpush1.msra.mxu0 0.0
        %780 = vmatprep.subr.mxu0 0.0
        %781 = vmatpush1.msra.mxu0 0.0
        %782 = vmatprep.subr.mxu0 0.0
        %783 = vmatpush1.msra.mxu0 0.0
        %784 = vmatprep.subr.mxu0 0.0
        %785 = vmatpush1.msra.mxu0 0.0
        %786 = vmatprep.subr.mxu0 0.0
        %787 = vmatpush1.msra.mxu0 0.0
        %788 = vmatprep.subr.mxu0 0.0
        %789 = vmatpush1.msra.mxu0 0.0
        %790 = vmatprep.subr.mxu0 0.0
        %791 = vmatpush1.msra.mxu0 0.0
        %792 = vmatprep.subr.mxu0 0.0
        %793 = vmatpush1.msra.mxu0 0.0
        %794 = vmatprep.subr.mxu0 0.0
        %795 = vmatpush1.msra.mxu0 0.0
        %796 = vmatprep.subr.mxu0 0.0
        %797 = vmatpush1.msra.mxu0 0.0
        %798 = vmatprep.subr.mxu0 0.0
        %799 = vmatpush1.msra.mxu0 0.0
        %800 = vmatprep.subr.mxu0 0.0
        %801 = vmatpush1.msra.mxu0 0.0
        %802 = vmatprep.subr.mxu0 0.0
        %803 = vmatpush1.msra.mxu0 0.0
        %804 = vmatprep.subr.mxu0 0.0
        %805 = vmatpush1.msra.mxu0 0.0
        %806 = vmatprep.subr.mxu0 0.0
        %807 = vmatpush1.msra.mxu0 0.0
        %808 = vmatprep.subr.mxu0 0.0
        %809 = vmatpush1.msra.mxu0 0.0
        %810 = vmatprep.subr.mxu0 0.0
        %811 = vmatpush1.msra.mxu0 0.0
        %812 = vmatprep.subr.mxu0 0.0
        %813 = vmatpush1.msra.mxu0 0.0
        %814 = vmatprep.subr.mxu0 0.0
        %815 = vmatpush1.msra.mxu0 0.0
        %816 = vmatprep.subr.mxu0 0.0
        %817 = vmatpush1.msra.mxu0 0.0
        %818 = vmatprep.subr.mxu0 0.0
        %819 = vmatpush1.msra.mxu0 0.0
        %820 = vmatprep.subr.mxu0 0.0
        %821 = vmatpush1.msra.mxu0 0.0
        %822 = vmatprep.subr.mxu0 0.0
        %823 = vmatpush1.msra.mxu0 0.0
        %824 = vmatprep.subr.mxu0 0.0
        %825 = vmatpush1.msra.mxu0 0.0
        %826 = vmatprep.subr.mxu0 0.0
        %827 = vmatpush1.msra.mxu0 0.0
        %828 = vmatprep.subr.mxu0 0.0
        %829 = vmatpush1.msra.mxu0 0.0
        %830 = vmatprep.subr.mxu0 0.0
        %831 = vmatpush1.msra.mxu0 0.0
        %832 = vmatprep.subr.mxu0 0.0
        %833 = vmatpush1.msra.mxu0 0.0
        %834 = vmatprep.mubr.f32.mxu0 0.0
        %835 = vmatmul.mubr.f32.gmra.mrb[0].mxu0 %v768
        %v836 = vpop.f32.mrb[0].mxu0
        %v837 = vadd.f32 %v764, %v836
        %v838 = vpop.f32.mrb[0].mxu0
        %839 = vdwg.mxu0
        %s840 = scalar_lea.vmem %s616, 8
        %v841 = vld [vmem:[%s840] sm:$0xff]
        %v842 = vsel %vm651, %v841, 0.0
        %843 = vadd.xlane.f32.xlu0 %v842
        %v844 = vpop.xlane.xlu0 %843
        %v845 = vmul.f32 %v844, %v655
        %v846 = vsub.f32 %v841, %v845
        %v847 = vmul.f32 %v846, %v846
        %v848 = vsel %vm651, %v847, 0.0
        %849 = vadd.xlane.f32.xlu0 %v848
        %v850 = vpop.xlane.xlu0 %849
        %v851 = vmul.f32 %v850, %v655
        %v852 = vadd.f32 %v851, 1e-05
        %v853 = vrsqrt.pop %v852
        %v854 = vmul.f32 %v852, %v853
        %v855 = vmul.f32 %v846, %v853
        %s856 = sadd.s32 %s667, 1
        %s857 = sld [smem:[#allocation2 + %s856]]
        %v858 = vstv %s857
        %v859 = vmul.f32 %v855, %v858
        %s860 = sld [smem:[#allocation5 + %s856]]
        %v861 = vstv %s860
        %v862 = vadd.f32 %v859, %v861
        %v864 = vsel %vm651, %v862, 0
        %866 = vmatprep.subr.mxu0 0.0
        %867 = vmatpush1.msra.mxu0 %v685
        %868 = vmatprep.subr.mxu0 0.0
        %869 = vmatpush1.msra.mxu0 0.0
        %870 = vmatprep.subr.mxu0 0.0
        %871 = vmatpush1.msra.mxu0 0.0
        %872 = vmatprep.subr.mxu0 0.0
        %873 = vmatpush1.msra.mxu0 0.0
        %874 = vmatprep.subr.mxu0 0.0
        %875 = vmatpush1.msra.mxu0 0.0
        %876 = vmatprep.subr.mxu0 0.0
        %877 = vmatpush1.msra.mxu0 0.0
        %878 = vmatprep.subr.mxu0 0.0
        %879 = vmatpush1.msra.mxu0 0.0
        %880 = vmatprep.subr.mxu0 0.0
        %881 = vmatpush1.msra.mxu0 0.0
        %882 = vmatprep.subr.mxu0 0.0
        %883 = vmatpush1.msra.mxu0 0.0
        %884 = vmatprep.subr.mxu0 0.0
        %885 = vmatpush1.msra.mxu0 0.0
        %886 = vmatprep.subr.mxu0 0.0
        %887 = vmatpush1.msra.mxu0 0.0
        %888 = vmatprep.subr.mxu0 0.0
        %889 = vmatpush1.msra.mxu0 0.0
        %890 = vmatprep.subr.mxu0 0.0
        %891 = vmatpush1.msra.mxu0 0.0
        %892 = vmatprep.subr.mxu0 0.0
        %893 = vmatpush1.msra.mxu0 0.0
        %894 = vmatprep.subr.mxu0 0.0
        %895 = vmatpush1.msra.mxu0 0.0
        %896 = vmatprep.subr.mxu0 0.0
        %897 = vmatpush1.msra.mxu0 0.0
        %898 = vmatprep.subr.mxu0 0.0
        %899 = vmatpush1.msra.mxu0 0.0
        %900 = vmatprep.subr.mxu0 0.0
        %901 = vmatpush1.msra.mxu0 0.0
        %902 = vmatprep.subr.mxu0 0.0
        %903 = vmatpush1.msra.mxu0 0.0
        %904 = vmatprep.subr.mxu0 0.0
        %905 = vmatpush1.msra.mxu0 0.0
        %906 = vmatprep.subr.mxu0 0.0
        %907 = vmatpush1.msra.mxu0 0.0
        %908 = vmatprep.subr.mxu0 0.0
        %909 = vmatpush1.msra.mxu0 0.0
        %910 = vmatprep.subr.mxu0 0.0
        %911 = vmatpush1.msra.mxu0 0.0
        %912 = vmatprep.subr.mxu0 0.0
        %913 = vmatpush1.msra.mxu0 0.0
        %914 = vmatprep.subr.mxu0 0.0
        %915 = vmatpush1.msra.mxu0 0.0
        %916 = vmatprep.subr.mxu0 0.0
        %917 = vmatpush1.msra.mxu0 0.0
        %918 = vmatprep.subr.mxu0 0.0
        %919 = vmatpush1.msra.mxu0 0.0
        %920 = vmatprep.subr.mxu0 0.0
        %921 = vmatpush1.msra.mxu0 0.0
        %922 = vmatprep.subr.mxu0 0.0
        %923 = vmatpush1.msra.mxu0 0.0
        %924 = vmatprep.subr.mxu0 0.0
        %925 = vmatpush1.msra.mxu0 0.0
        %926 = vmatprep.subr.mxu0 0.0
        %927 = vmatpush1.msra.mxu0 0.0
        %928 = vmatprep.subr.mxu0 0.0
        %929 = vmatpush1.msra.mxu0 0.0
        %930 = vmatprep.mubr.f32.mxu0 0.0
        %931 = vmatmul.mubr.f32.gmra.mrb[0].mxu0 %v864
        %v932 = vpop.f32.mrb[0].mxu0
        %v933 = vadd.f32 %v678, %v932
        %v934 = vpop.f32.mrb[0].mxu0
        %935 = vdwg.mxu0
        %vm936 = vcmp.ge.f32.partialorder %v933, 0.0
        %v937 = vmul.f32 %v933, 0.01
        %v938 = vsel %vm936, %v933, %v937
        %v940 = vsel %vm766, %v938, 0
        %942 = vmatprep.subr.mxu0 0.0
        %943 = vmatpush1.msra.mxu0 %v642
        %944 = vmatprep.subr.mxu0 0.0
        %945 = vmatpush1.msra.mxu0 %v643
        %946 = vmatprep.subr.mxu0 0.0
        %947 = vmatpush1.msra.mxu0 %v644
        %948 = vmatprep.subr.mxu0 0.0
        %949 = vmatpush1.msra.mxu0 %v645
        %950 = vmatprep.subr.mxu0 0.0
        %951 = vmatpush1.msra.mxu0 0.0
        %952 = vmatprep.subr.mxu0 0.0
        %953 = vmatpush1.msra.mxu0 0.0
        %954 = vmatprep.subr.mxu0 0.0
        %955 = vmatpush1.msra.mxu0 0.0
        %956 = vmatprep.subr.mxu0 0.0
        %957 = vmatpush1.msra.mxu0 0.0
        %958 = vmatprep.subr.mxu0 0.0
        %959 = vmatpush1.msra.mxu0 0.0
        %960 = vmatprep.subr.mxu0 0.0
        %961 = vmatpush1.msra.mxu0 0.0
        %962 = vmatprep.subr.mxu0 0.0
        %963 = vmatpush1.msra.mxu0 0.0
        %964 = vmatprep.subr.mxu0 0.0
        %965 = vmatpush1.msra.mxu0 0.0
        %966 = vmatprep.subr.mxu0 0.0
        %967 = vmatpush1.msra.mxu0 0.0
        %968 = vmatprep.subr.mxu0 0.0
        %969 = vmatpush1.msra.mxu0 0.0
        %970 = vmatprep.subr.mxu0 0.0
        %971 = vmatpush1.msra.mxu0 0.0
        %972 = vmatprep.subr.mxu0 0.0
        %973 = vmatpush1.msra.mxu0 0.0
        %974 = vmatprep.subr.mxu0 0.0
        %975 = vmatpush1.msra.mxu0 0.0
        %976 = vmatprep.subr.mxu0 0.0
        %977 = vmatpush1.msra.mxu0 0.0
        %978 = vmatprep.subr.mxu0 0.0
        %979 = vmatpush1.msra.mxu0 0.0
        %980 = vmatprep.subr.mxu0 0.0
        %981 = vmatpush1.msra.mxu0 0.0
        %982 = vmatprep.subr.mxu0 0.0
        %983 = vmatpush1.msra.mxu0 0.0
        %984 = vmatprep.subr.mxu0 0.0
        %985 = vmatpush1.msra.mxu0 0.0
        %986 = vmatprep.subr.mxu0 0.0
        %987 = vmatpush1.msra.mxu0 0.0
        %988 = vmatprep.subr.mxu0 0.0
        %989 = vmatpush1.msra.mxu0 0.0
        %990 = vmatprep.subr.mxu0 0.0
        %991 = vmatpush1.msra.mxu0 0.0
        %992 = vmatprep.subr.mxu0 0.0
        %993 = vmatpush1.msra.mxu0 0.0
        %994 = vmatprep.subr.mxu0 0.0
        %995 = vmatpush1.msra.mxu0 0.0
        %996 = vmatprep.subr.mxu0 0.0
        %997 = vmatpush1.msra.mxu0 0.0
        %998 = vmatprep.subr.mxu0 0.0
        %999 = vmatpush1.msra.mxu0 0.0
        %1000 = vmatprep.subr.mxu0 0.0
        %1001 = vmatpush1.msra.mxu0 0.0
        %1002 = vmatprep.subr.mxu0 0.0
        %1003 = vmatpush1.msra.mxu0 0.0
        %1004 = vmatprep.subr.mxu0 0.0
        %1005 = vmatpush1.msra.mxu0 0.0
        %1006 = vmatprep.mubr.f32.mxu0 0.0
        %1007 = vmatmul.mubr.f32.gmra.mrb[0].mxu0 %v940
        %v1008 = vpop.f32.mrb[0].mxu0
        %v1009 = vadd.f32 %v764, %v1008
        %v1010 = vpop.f32.mrb[0].mxu0
        %1011 = vdwg.mxu0
        %s1012 = scalar_lea.vmem %s616, 16
        %v1013 = vld [vmem:[%s1012] sm:$0xff]
        %v1014 = vsel %vm651, %v1013, 0.0
        %1015 = vadd.xlane.f32.xlu0 %v1014
        %v1016 = vpop.xlane.xlu0 %1015
        %v1017 = vmul.f32 %v1016, %v655
        %v1018 = vsub.f32 %v1013, %v1017
        %v1019 = vmul.f32 %v1018, %v1018
        %v1020 = vsel %vm651, %v1019, 0.0
        %1021 = vadd.xlane.f32.xlu0 %v1020
        %v1022 = vpop.xlane.xlu0 %1021
        %v1023 = vmul.f32 %v1022, %v655
        %v1024 = vadd.f32 %v1023, 1e-05
        %v1025 = vrsqrt.pop %v1024
        %v1026 = vmul.f32 %v1024, %v1025
        %v1027 = vmul.f32 %v1018, %v1025
        %s1028 = sadd.s32 %s667, 2
        %s1029 = sld [smem:[#allocation2 + %s1028]]
        %v1030 = vstv %s1029
        %v1031 = vmul.f32 %v1027, %v1030
        %s1032 = sld [smem:[#allocation5 + %s1028]]
        %v1033 = vstv %s1032
        %v1034 = vadd.f32 %v1031, %v1033
        %v1036 = vsel %vm651, %v1034, 0
        %1038 = vmatprep.subr.mxu0 0.0
        %1039 = vmatpush1.msra.mxu0 %v685
        %1040 = vmatprep.subr.mxu0 0.0
        %1041 = vmatpush1.msra.mxu0 0.0
        %1042 = vmatprep.subr.mxu0 0.0
        %1043 = vmatpush1.msra.mxu0 0.0
        %1044 = vmatprep.subr.mxu0 0.0
        %1045 = vmatpush1.msra.mxu0 0.0
        %1046 = vmatprep.subr.mxu0 0.0
        %1047 = vmatpush1.msra.mxu0 0.0
        %1048 = vmatprep.subr.mxu0 0.0
        %1049 = vmatpush1.msra.mxu0 0.0
        %1050 = vmatprep.subr.mxu0 0.0
        %1051 = vmatpush1.msra.mxu0 0.0
        %1052 = vmatprep.subr.mxu0 0.0
        %1053 = vmatpush1.msra.mxu0 0.0
        %1054 = vmatprep.subr.mxu0 0.0
        %1055 = vmatpush1.msra.mxu0 0.0
        %1056 = vmatprep.subr.mxu0 0.0
        %1057 = vmatpush1.msra.mxu0 0.0
        %1058 = vmatprep.subr.mxu0 0.0
        %1059 = vmatpush1.msra.mxu0 0.0
        %1060 = vmatprep.subr.mxu0 0.0
        %1061 = vmatpush1.msra.mxu0 0.0
        %1062 = vmatprep.subr.mxu0 0.0
        %1063 = vmatpush1.msra.mxu0 0.0
        %1064 = vmatprep.subr.mxu0 0.0
        %1065 = vmatpush1.msra.mxu0 0.0
        %1066 = vmatprep.subr.mxu0 0.0
        %1067 = vmatpush1.msra.mxu0 0.0
        %1068 = vmatprep.subr.mxu0 0.0
        %1069 = vmatpush1.msra.mxu0 0.0
        %1070 = vmatprep.subr.mxu0 0.0
        %1071 = vmatpush1.msra.mxu0 0.0
        %1072 = vmatprep.subr.mxu0 0.0
        %1073 = vmatpush1.msra.mxu0 0.0
        %1074 = vmatprep.subr.mxu0 0.0
        %1075 = vmatpush1.msra.mxu0 0.0
        %1076 = vmatprep.subr.mxu0 0.0
        %1077 = vmatpush1.msra.mxu0 0.0
        %1078 = vmatprep.subr.mxu0 0.0
        %1079 = vmatpush1.msra.mxu0 0.0
        %1080 = vmatprep.subr.mxu0 0.0
        %1081 = vmatpush1.msra.mxu0 0.0
        %1082 = vmatprep.subr.mxu0 0.0
        %1083 = vmatpush1.msra.mxu0 0.0
        %1084 = vmatprep.subr.mxu0 0.0
        %1085 = vmatpush1.msra.mxu0 0.0
        %1086 = vmatprep.subr.mxu0 0.0
        %1087 = vmatpush1.msra.mxu0 0.0
        %1088 = vmatprep.subr.mxu0 0.0
        %1089 = vmatpush1.msra.mxu0 0.0
        %1090 = vmatprep.subr.mxu0 0.0
        %1091 = vmatpush1.msra.mxu0 0.0
        %1092 = vmatprep.subr.mxu0 0.0
        %1093 = vmatpush1.msra.mxu0 0.0
        %1094 = vmatprep.subr.mxu0 0.0
        %1095 = vmatpush1.msra.mxu0 0.0
        %1096 = vmatprep.subr.mxu0 0.0
        %1097 = vmatpush1.msra.mxu0 0.0
        %1098 = vmatprep.subr.mxu0 0.0
        %1099 = vmatpush1.msra.mxu0 0.0
        %1100 = vmatprep.subr.mxu0 0.0
        %1101 = vmatpush1.msra.mxu0 0.0
        %1102 = vmatprep.mubr.f32.mxu0 0.0
        %1103 = vmatmul.mubr.f32.gmra.mrb[0].mxu0 %v1036
        %v1104 = vpop.f32.mrb[0].mxu0
        %v1105 = vadd.f32 %v678, %v1104
        %v1106 = vpop.f32.mrb[0].mxu0
        %1107 = vdwg.mxu0
        %vm1108 = vcmp.ge.f32.partialorder %v1105, 0.0
        %v1109 = vmul.f32 %v1105, 0.01
        %v1110 = vsel %vm1108, %v1105, %v1109
        %v1112 = vsel %vm766, %v1110, 0
        %1114 = vmatprep.subr.mxu0 0.0
        %1115 = vmatpush1.msra.mxu0 %v642
        %1116 = vmatprep.subr.mxu0 0.0
        %1117 = vmatpush1.msra.mxu0 %v643
        %1118 = vmatprep.subr.mxu0 0.0
        %1119 = vmatpush1.msra.mxu0 %v644
        %1120 = vmatprep.subr.mxu0 0.0
        %1121 = vmatpush1.msra.mxu0 %v645
        %1122 = vmatprep.subr.mxu0 0.0
        %1123 = vmatpush1.msra.mxu0 0.0
        %1124 = vmatprep.subr.mxu0 0.0
        %1125 = vmatpush1.msra.mxu0 0.0
        %1126 = vmatprep.subr.mxu0 0.0
        %1127 = vmatpush1.msra.mxu0 0.0
        %1128 = vmatprep.subr.mxu0 0.0
        %1129 = vmatpush1.msra.mxu0 0.0
        %1130 = vmatprep.subr.mxu0 0.0
        %1131 = vmatpush1.msra.mxu0 0.0
        %1132 = vmatprep.subr.mxu0 0.0
        %1133 = vmatpush1.msra.mxu0 0.0
        %1134 = vmatprep.subr.mxu0 0.0
        %1135 = vmatpush1.msra.mxu0 0.0
        %1136 = vmatprep.subr.mxu0 0.0
        %1137 = vmatpush1.msra.mxu0 0.0
        %1138 = vmatprep.subr.mxu0 0.0
        %1139 = vmatpush1.msra.mxu0 0.0
        %1140 = vmatprep.subr.mxu0 0.0
        %1141 = vmatpush1.msra.mxu0 0.0
        %1142 = vmatprep.subr.mxu0 0.0
        %1143 = vmatpush1.msra.mxu0 0.0
        %1144 = vmatprep.subr.mxu0 0.0
        %1145 = vmatpush1.msra.mxu0 0.0
        %1146 = vmatprep.subr.mxu0 0.0
        %1147 = vmatpush1.msra.mxu0 0.0
        %1148 = vmatprep.subr.mxu0 0.0
        %1149 = vmatpush1.msra.mxu0 0.0
        %1150 = vmatprep.subr.mxu0 0.0
        %1151 = vmatpush1.msra.mxu0 0.0
        %1152 = vmatprep.subr.mxu0 0.0
        %1153 = vmatpush1.msra.mxu0 0.0
        %1154 = vmatprep.subr.mxu0 0.0
        %1155 = vmatpush1.msra.mxu0 0.0
        %1156 = vmatprep.subr.mxu0 0.0
        %1157 = vmatpush1.msra.mxu0 0.0
        %1158 = vmatprep.subr.mxu0 0.0
        %1159 = vmatpush1.msra.mxu0 0.0
        %1160 = vmatprep.subr.mxu0 0.0
        %1161 = vmatpush1.msra.mxu0 0.0
        %1162 = vmatprep.subr.mxu0 0.0
        %1163 = vmatpush1.msra.mxu0 0.0
        %1164 = vmatprep.subr.mxu0 0.0
        %1165 = vmatpush1.msra.mxu0 0.0
        %1166 = vmatprep.subr.mxu0 0.0
        %1167 = vmatpush1.msra.mxu0 0.0
        %1168 = vmatprep.subr.mxu0 0.0
        %1169 = vmatpush1.msra.mxu0 0.0
        %1170 = vmatprep.subr.mxu0 0.0
        %1171 = vmatpush1.msra.mxu0 0.0
        %1172 = vmatprep.subr.mxu0 0.0
        %1173 = vmatpush1.msra.mxu0 0.0
        %1174 = vmatprep.subr.mxu0 0.0
        %1175 = vmatpush1.msra.mxu0 0.0
        %1176 = vmatprep.subr.mxu0 0.0
        %1177 = vmatpush1.msra.mxu0 0.0
        %1178 = vmatprep.mubr.f32.mxu0 0.0
        %1179 = vmatmul.mubr.f32.gmra.mrb[0].mxu0 %v1112
        %v1180 = vpop.f32.mrb[0].mxu0
        %v1181 = vadd.f32 %v764, %v1180
        %v1182 = vpop.f32.mrb[0].mxu0
        %1183 = vdwg.mxu0
        %s1184 = scalar_lea.vmem %s616, 24
        %v1185 = vld [vmem:[%s1184] sm:$0xff]
        %v1186 = vsel %vm651, %v1185, 0.0
        %1187 = vadd.xlane.f32.xlu0 %v1186
        %v1188 = vpop.xlane.xlu0 %1187
        %v1189 = vmul.f32 %v1188, %v655
        %v1190 = vsub.f32 %v1185, %v1189
        %v1191 = vmul.f32 %v1190, %v1190
        %v1192 = vsel %vm651, %v1191, 0.0
        %1193 = vadd.xlane.f32.xlu0 %v1192
        %v1194 = vpop.xlane.xlu0 %1193
        %v1195 = vmul.f32 %v1194, %v655
        %v1196 = vadd.f32 %v1195, 1e-05
        %v1197 = vrsqrt.pop %v1196
        %v1198 = vmul.f32 %v1196, %v1197
        %v1199 = vmul.f32 %v1190, %v1197
        %s1200 = sadd.s32 %s667, 3
        %s1201 = sld [smem:[#allocation2 + %s1200]]
        %v1202 = vstv %s1201
        %v1203 = vmul.f32 %v1199, %v1202
        %s1204 = sld [smem:[#allocation5 + %s1200]]
        %v1205 = vstv %s1204
        %v1206 = vadd.f32 %v1203, %v1205
        %v1208 = vsel %vm651, %v1206, 0
        %1210 = vmatprep.subr.mxu0 0.0
        %1211 = vmatpush1.msra.mxu0 %v685
        %1212 = vmatprep.subr.mxu0 0.0
        %1213 = vmatpush1.msra.mxu0 0.0
        %1214 = vmatprep.subr.mxu0 0.0
        %1215 = vmatpush1.msra.mxu0 0.0
        %1216 = vmatprep.subr.mxu0 0.0
        %1217 = vmatpush1.msra.mxu0 0.0
        %1218 = vmatprep.subr.mxu0 0.0
        %1219 = vmatpush1.msra.mxu0 0.0
        %1220 = vmatprep.subr.mxu0 0.0
        %1221 = vmatpush1.msra.mxu0 0.0
        %1222 = vmatprep.subr.mxu0 0.0
        %1223 = vmatpush1.msra.mxu0 0.0
        %1224 = vmatprep.subr.mxu0 0.0
        %1225 = vmatpush1.msra.mxu0 0.0
        %1226 = vmatprep.subr.mxu0 0.0
        %1227 = vmatpush1.msra.mxu0 0.0
        %1228 = vmatprep.subr.mxu0 0.0
        %1229 = vmatpush1.msra.mxu0 0.0
        %1230 = vmatprep.subr.mxu0 0.0
        %1231 = vmatpush1.msra.mxu0 0.0
        %1232 = vmatprep.subr.mxu0 0.0
        %1233 = vmatpush1.msra.mxu0 0.0
        %1234 = vmatprep.subr.mxu0 0.0
        %1235 = vmatpush1.msra.mxu0 0.0
        %1236 = vmatprep.subr.mxu0 0.0
        %1237 = vmatpush1.msra.mxu0 0.0
        %1238 = vmatprep.subr.mxu0 0.0
        %1239 = vmatpush1.msra.mxu0 0.0
        %1240 = vmatprep.subr.mxu0 0.0
        %1241 = vmatpush1.msra.mxu0 0.0
        %1242 = vmatprep.subr.mxu0 0.0
        %1243 = vmatpush1.msra.mxu0 0.0
        %1244 = vmatprep.subr.mxu0 0.0
        %1245 = vmatpush1.msra.mxu0 0.0
        %1246 = vmatprep.subr.mxu0 0.0
        %1247 = vmatpush1.msra.mxu0 0.0
        %1248 = vmatprep.subr.mxu0 0.0
        %1249 = vmatpush1.msra.mxu0 0.0
        %1250 = vmatprep.subr.mxu0 0.0
        %1251 = vmatpush1.msra.mxu0 0.0
        %1252 = vmatprep.subr.mxu0 0.0
        %1253 = vmatpush1.msra.mxu0 0.0
        %1254 = vmatprep.subr.mxu0 0.0
        %1255 = vmatpush1.msra.mxu0 0.0
        %1256 = vmatprep.subr.mxu0 0.0
        %1257 = vmatpush1.msra.mxu0 0.0
        %1258 = vmatprep.subr.mxu0 0.0
        %1259 = vmatpush1.msra.mxu0 0.0
        %1260 = vmatprep.subr.mxu0 0.0
        %1261 = vmatpush1.msra.mxu0 0.0
        %1262 = vmatprep.subr.mxu0 0.0
        %1263 = vmatpush1.msra.mxu0 0.0
        %1264 = vmatprep.subr.mxu0 0.0
        %1265 = vmatpush1.msra.mxu0 0.0
        %1266 = vmatprep.subr.mxu0 0.0
        %1267 = vmatpush1.msra.mxu0 0.0
        %1268 = vmatprep.subr.mxu0 0.0
        %1269 = vmatpush1.msra.mxu0 0.0
        %1270 = vmatprep.subr.mxu0 0.0
        %1271 = vmatpush1.msra.mxu0 0.0
        %1272 = vmatprep.subr.mxu0 0.0
        %1273 = vmatpush1.msra.mxu0 0.0
        %1274 = vmatprep.mubr.f32.mxu0 0.0
        %1275 = vmatmul.mubr.f32.gmra.mrb[0].mxu0 %v1208
        %v1276 = vpop.f32.mrb[0].mxu0
        %v1277 = vadd.f32 %v678, %v1276
        %v1278 = vpop.f32.mrb[0].mxu0
        %1279 = vdwg.mxu0
        %vm1280 = vcmp.ge.f32.partialorder %v1277, 0.0
        %v1281 = vmul.f32 %v1277, 0.01
        %v1282 = vsel %vm1280, %v1277, %v1281
        %v1284 = vsel %vm766, %v1282, 0
        %1286 = vmatprep.subr.mxu0 0.0
        %1287 = vmatpush1.msra.mxu0 %v642
        %1288 = vmatprep.subr.mxu0 0.0
        %1289 = vmatpush1.msra.mxu0 %v643
        %1290 = vmatprep.subr.mxu0 0.0
        %1291 = vmatpush1.msra.mxu0 %v644
        %1292 = vmatprep.subr.mxu0 0.0
        %1293 = vmatpush1.msra.mxu0 %v645
        %1294 = vmatprep.subr.mxu0 0.0
        %1295 = vmatpush1.msra.mxu0 0.0
        %1296 = vmatprep.subr.mxu0 0.0
        %1297 = vmatpush1.msra.mxu0 0.0
        %1298 = vmatprep.subr.mxu0 0.0
        %1299 = vmatpush1.msra.mxu0 0.0
        %1300 = vmatprep.subr.mxu0 0.0
        %1301 = vmatpush1.msra.mxu0 0.0
        %1302 = vmatprep.subr.mxu0 0.0
        %1303 = vmatpush1.msra.mxu0 0.0
        %1304 = vmatprep.subr.mxu0 0.0
        %1305 = vmatpush1.msra.mxu0 0.0
        %1306 = vmatprep.subr.mxu0 0.0
        %1307 = vmatpush1.msra.mxu0 0.0
        %1308 = vmatprep.subr.mxu0 0.0
        %1309 = vmatpush1.msra.mxu0 0.0
        %1310 = vmatprep.subr.mxu0 0.0
        %1311 = vmatpush1.msra.mxu0 0.0
        %1312 = vmatprep.subr.mxu0 0.0
        %1313 = vmatpush1.msra.mxu0 0.0
        %1314 = vmatprep.subr.mxu0 0.0
        %1315 = vmatpush1.msra.mxu0 0.0
        %1316 = vmatprep.subr.mxu0 0.0
        %1317 = vmatpush1.msra.mxu0 0.0
        %1318 = vmatprep.subr.mxu0 0.0
        %1319 = vmatpush1.msra.mxu0 0.0
        %1320 = vmatprep.subr.mxu0 0.0
        %1321 = vmatpush1.msra.mxu0 0.0
        %1322 = vmatprep.subr.mxu0 0.0
        %1323 = vmatpush1.msra.mxu0 0.0
        %1324 = vmatprep.subr.mxu0 0.0
        %1325 = vmatpush1.msra.mxu0 0.0
        %1326 = vmatprep.subr.mxu0 0.0
        %1327 = vmatpush1.msra.mxu0 0.0
        %1328 = vmatprep.subr.mxu0 0.0
        %1329 = vmatpush1.msra.mxu0 0.0
        %1330 = vmatprep.subr.mxu0 0.0
        %1331 = vmatpush1.msra.mxu0 0.0
        %1332 = vmatprep.subr.mxu0 0.0
        %1333 = vmatpush1.msra.mxu0 0.0
        %1334 = vmatprep.subr.mxu0 0.0
        %1335 = vmatpush1.msra.mxu0 0.0
        %1336 = vmatprep.subr.mxu0 0.0
        %1337 = vmatpush1.msra.mxu0 0.0
        %1338 = vmatprep.subr.mxu0 0.0
        %1339 = vmatpush1.msra.mxu0 0.0
        %1340 = vmatprep.subr.mxu0 0.0
        %1341 = vmatpush1.msra.mxu0 0.0
        %1342 = vmatprep.subr.mxu0 0.0
        %1343 = vmatpush1.msra.mxu0 0.0
        %1344 = vmatprep.subr.mxu0 0.0
        %1345 = vmatpush1.msra.mxu0 0.0
        %1346 = vmatprep.subr.mxu0 0.0
        %1347 = vmatpush1.msra.mxu0 0.0
        %1348 = vmatprep.subr.mxu0 0.0
        %1349 = vmatpush1.msra.mxu0 0.0
        %1350 = vmatprep.mubr.f32.mxu0 0.0
        %1351 = vmatmul.mubr.f32.gmra.mrb[0].mxu0 %v1284
        %v1352 = vpop.f32.mrb[0].mxu0
        %v1353 = vadd.f32 %v764, %v1352
        %v1354 = vpop.f32.mrb[0].mxu0
        %1355 = vdwg.mxu0
        %s1356 = sld [smem:[#allocation8 + %s667]]
        %v1357 = vstv %s1356
        %v1358 = vadd.f32 %v837, %v1357
        %s1359 = sld [smem:[#allocation7 + %s667]]
        %v1360 = vstv %s1359
        %v1361 = vmul.f32 %v1360, %v837
        %v1362 = vadd.f32 %v1358, %v1361
        %s1363 = sld [smem:[#allocation7 + %s856]]
        %v1364 = vstv %s1363
        %v1365 = vmul.f32 %v1364, %v1009
        %v1366 = vadd.f32 %v1362, %v1365
        %s1367 = sld [smem:[#allocation7 + %s1028]]
        %v1368 = vstv %s1367
        %v1369 = vmul.f32 %v1368, %v1181
        %v1370 = vadd.f32 %v1366, %v1369
        %s1371 = sld [smem:[#allocation7 + %s1200]]
        %v1372 = vstv %s1371
        %v1373 = vmul.f32 %v1372, %v1353
        %v1374 = vadd.f32 %v1370, %v1373
        %v1376 = vlaneseq
        %v1377 = vshrl.u32 %v1376, 7
        %v1378 = vsub.s32 0, %v1377
        %v1379 = vrot.slane %v649, %v1378
        %vm1381 = vcmask 130048
        %v1383 = vsel %vm1381, %v1374, 0
        %1385 = vmatprep.subr.mxu0 0.0
        %1386 = vmatpush1.msra.mxu0 %v647
        %1387 = vmatprep.subr.mxu0 0.0
        %1388 = vmatpush1.msra.mxu0 %v648
        %1389 = vmatprep.subr.mxu0 0.0
        %1390 = vmatpush1.msra.mxu0 0.0
        %1391 = vmatprep.subr.mxu0 0.0
        %1392 = vmatpush1.msra.mxu0 0.0
        %1393 = vmatprep.subr.mxu0 0.0
        %1394 = vmatpush1.msra.mxu0 0.0
        %1395 = vmatprep.subr.mxu0 0.0
        %1396 = vmatpush1.msra.mxu0 0.0
        %1397 = vmatprep.subr.mxu0 0.0
        %1398 = vmatpush1.msra.mxu0 0.0
        %1399 = vmatprep.subr.mxu0 0.0
        %1400 = vmatpush1.msra.mxu0 0.0
        %1401 = vmatprep.subr.mxu0 0.0
        %1402 = vmatpush1.msra.mxu0 0.0
        %1403 = vmatprep.subr.mxu0 0.0
        %1404 = vmatpush1.msra.mxu0 0.0
        %1405 = vmatprep.subr.mxu0 0.0
        %1406 = vmatpush1.msra.mxu0 0.0
        %1407 = vmatprep.subr.mxu0 0.0
        %1408 = vmatpush1.msra.mxu0 0.0
        %1409 = vmatprep.subr.mxu0 0.0
        %1410 = vmatpush1.msra.mxu0 0.0
        %1411 = vmatprep.subr.mxu0 0.0
        %1412 = vmatpush1.msra.mxu0 0.0
        %1413 = vmatprep.subr.mxu0 0.0
        %1414 = vmatpush1.msra.mxu0 0.0
        %1415 = vmatprep.subr.mxu0 0.0
        %1416 = vmatpush1.msra.mxu0 0.0
        %1417 = vmatprep.subr.mxu0 0.0
        %1418 = vmatpush1.msra.mxu0 0.0
        %1419 = vmatprep.subr.mxu0 0.0
        %1420 = vmatpush1.msra.mxu0 0.0
        %1421 = vmatprep.subr.mxu0 0.0
        %1422 = vmatpush1.msra.mxu0 0.0
        %1423 = vmatprep.subr.mxu0 0.0
        %1424 = vmatpush1.msra.mxu0 0.0
        %1425 = vmatprep.subr.mxu0 0.0
        %1426 = vmatpush1.msra.mxu0 0.0
        %1427 = vmatprep.subr.mxu0 0.0
        %1428 = vmatpush1.msra.mxu0 0.0
        %1429 = vmatprep.subr.mxu0 0.0
        %1430 = vmatpush1.msra.mxu0 0.0
        %1431 = vmatprep.subr.mxu0 0.0
        %1432 = vmatpush1.msra.mxu0 0.0
        %1433 = vmatprep.subr.mxu0 0.0
        %1434 = vmatpush1.msra.mxu0 0.0
        %1435 = vmatprep.subr.mxu0 0.0
        %1436 = vmatpush1.msra.mxu0 0.0
        %1437 = vmatprep.subr.mxu0 0.0
        %1438 = vmatpush1.msra.mxu0 0.0
        %1439 = vmatprep.subr.mxu0 0.0
        %1440 = vmatpush1.msra.mxu0 0.0
        %1441 = vmatprep.subr.mxu0 0.0
        %1442 = vmatpush1.msra.mxu0 0.0
        %1443 = vmatprep.subr.mxu0 0.0
        %1444 = vmatpush1.msra.mxu0 0.0
        %1445 = vmatprep.subr.mxu0 0.0
        %1446 = vmatpush1.msra.mxu0 0.0
        %1447 = vmatprep.subr.mxu0 0.0
        %1448 = vmatpush1.msra.mxu0 0.0
        %1449 = vmatprep.mubr.f32.mxu0 0.0
        %1450 = vmatmul.mubr.f32.gmra.mrb[0].mxu0 %v1383
        %v1451 = vpop.f32.mrb[0].mxu0
        %v1452 = vadd.f32 %v1379, %v1451
        %v1453 = vpop.f32.mrb[0].mxu0
        %1454 = vdwg.mxu0
        %v1455 = vsub.f32 %v1452, %v672
        %v1456 = vstv %s668
        %v1457 = vrcp.pop %v1456
        %s1458 = vtos %v1457
        %v1459 = vstv %s1458
        %v1460 = vmul.f32 %v665, %v1459
        %v1461 = vmul.f32 %v1455, %v1460
        %v1462 = vadd.f32 %v1461, %v656
        %s1463 = sld [smem:[#allocation10 + %s667]]
        %v1464 = vstv %s1463
        %v1465 = vmul.f32 %v1464, %v1462
        %s1466 = sld [smem:[#allocation8 + %s856]]
        %v1467 = vstv %s1466
        %v1468 = vadd.f32 %v1009, %v1467
        %s1469 = sadd.s32 %s667, 4
        %s1470 = sld [smem:[#allocation7 + %s1469]]
        %v1471 = vstv %s1470
        %v1472 = vmul.f32 %v1471, %v837
        %v1473 = vadd.f32 %v1468, %v1472
        %s1474 = sadd.s32 %s667, 5
        %s1475 = sld [smem:[#allocation7 + %s1474]]
        %v1476 = vstv %s1475
        %v1477 = vmul.f32 %v1476, %v1009
        %v1478 = vadd.f32 %v1473, %v1477
        %s1479 = sadd.s32 %s667, 6
        %s1480 = sld [smem:[#allocation7 + %s1479]]
        %v1481 = vstv %s1480
        %v1482 = vmul.f32 %v1481, %v1181
        %v1483 = vadd.f32 %v1478, %v1482
        %s1484 = sadd.s32 %s667, 7
        %s1485 = sld [smem:[#allocation7 + %s1484]]
        %v1486 = vstv %s1485
        %v1487 = vmul.f32 %v1486, %v1353
        %v1488 = vadd.f32 %v1483, %v1487
        %v1490 = vsel %vm1381, %v1488, 0
        %1492 = vmatprep.subr.mxu0 0.0
        %1493 = vmatpush1.msra.mxu0 %v647
        %1494 = vmatprep.subr.mxu0 0.0
        %1495 = vmatpush1.msra.mxu0 %v648
        %1496 = vmatprep.subr.mxu0 0.0
        %1497 = vmatpush1.msra.mxu0 0.0
        %1498 = vmatprep.subr.mxu0 0.0
        %1499 = vmatpush1.msra.mxu0 0.0
        %1500 = vmatprep.subr.mxu0 0.0
        %1501 = vmatpush1.msra.mxu0 0.0
        %1502 = vmatprep.subr.mxu0 0.0
        %1503 = vmatpush1.msra.mxu0 0.0
        %1504 = vmatprep.subr.mxu0 0.0
        %1505 = vmatpush1.msra.mxu0 0.0
        %1506 = vmatprep.subr.mxu0 0.0
        %1507 = vmatpush1.msra.mxu0 0.0
        %1508 = vmatprep.subr.mxu0 0.0
        %1509 = vmatpush1.msra.mxu0 0.0
        %1510 = vmatprep.subr.mxu0 0.0
        %1511 = vmatpush1.msra.mxu0 0.0
        %1512 = vmatprep.subr.mxu0 0.0
        %1513 = vmatpush1.msra.mxu0 0.0
        %1514 = vmatprep.subr.mxu0 0.0
        %1515 = vmatpush1.msra.mxu0 0.0
        %1516 = vmatprep.subr.mxu0 0.0
        %1517 = vmatpush1.msra.mxu0 0.0
        %1518 = vmatprep.subr.mxu0 0.0
        %1519 = vmatpush1.msra.mxu0 0.0
        %1520 = vmatprep.subr.mxu0 0.0
        %1521 = vmatpush1.msra.mxu0 0.0
        %1522 = vmatprep.subr.mxu0 0.0
        %1523 = vmatpush1.msra.mxu0 0.0
        %1524 = vmatprep.subr.mxu0 0.0
        %1525 = vmatpush1.msra.mxu0 0.0
        %1526 = vmatprep.subr.mxu0 0.0
        %1527 = vmatpush1.msra.mxu0 0.0
        %1528 = vmatprep.subr.mxu0 0.0
        %1529 = vmatpush1.msra.mxu0 0.0
        %1530 = vmatprep.subr.mxu0 0.0
        %1531 = vmatpush1.msra.mxu0 0.0
        %1532 = vmatprep.subr.mxu0 0.0
        %1533 = vmatpush1.msra.mxu0 0.0
        %1534 = vmatprep.subr.mxu0 0.0
        %1535 = vmatpush1.msra.mxu0 0.0
        %1536 = vmatprep.subr.mxu0 0.0
        %1537 = vmatpush1.msra.mxu0 0.0
        %1538 = vmatprep.subr.mxu0 0.0
        %1539 = vmatpush1.msra.mxu0 0.0
        %1540 = vmatprep.subr.mxu0 0.0
        %1541 = vmatpush1.msra.mxu0 0.0
        %1542 = vmatprep.subr.mxu0 0.0
        %1543 = vmatpush1.msra.mxu0 0.0
        %1544 = vmatprep.subr.mxu0 0.0
        %1545 = vmatpush1.msra.mxu0 0.0
        %1546 = vmatprep.subr.mxu0 0.0
        %1547 = vmatpush1.msra.mxu0 0.0
        %1548 = vmatprep.subr.mxu0 0.0
        %1549 = vmatpush1.msra.mxu0 0.0
        %1550 = vmatprep.subr.mxu0 0.0
        %1551 = vmatpush1.msra.mxu0 0.0
        %1552 = vmatprep.subr.mxu0 0.0
        %1553 = vmatpush1.msra.mxu0 0.0
        %1554 = vmatprep.subr.mxu0 0.0
        %1555 = vmatpush1.msra.mxu0 0.0
        %1556 = vmatprep.mubr.f32.mxu0 0.0
        %1557 = vmatmul.mubr.f32.gmra.mrb[0].mxu0 %v1490
        %v1558 = vpop.f32.mrb[0].mxu0
        %v1559 = vadd.f32 %v1379, %v1558
        %v1560 = vpop.f32.mrb[0].mxu0
        %1561 = vdwg.mxu0
        %v1562 = vsub.f32 %v1559, %v861
        %v1563 = vstv %s857
        %v1564 = vrcp.pop %v1563
        %s1565 = vtos %v1564
        %v1566 = vstv %s1565
        %v1567 = vmul.f32 %v854, %v1566
        %v1568 = vmul.f32 %v1562, %v1567
        %v1569 = vadd.f32 %v1568, %v845
        %s1570 = sld [smem:[#allocation10 + %s856]]
        %v1571 = vstv %s1570
        %v1572 = vmul.f32 %v1571, %v1569
        %v1573 = vadd.f32 %v1465, %v1572
        %s1574 = sld [smem:[#allocation8 + %s1028]]
        %v1575 = vstv %s1574
        %v1576 = vadd.f32 %v1181, %v1575
        %s1577 = sadd.s32 %s667, 8
        %s1578 = sld [smem:[#allocation7 + %s1577]]
        %v1579 = vstv %s1578
        %v1580 = vmul.f32 %v1579, %v837
        %v1581 = vadd.f32 %v1576, %v1580
        %s1582 = sadd.s32 %s667, 9
        %s1583 = sld [smem:[#allocation7 + %s1582]]
        %v1584 = vstv %s1583
        %v1585 = vmul.f32 %v1584, %v1009
        %v1586 = vadd.f32 %v1581, %v1585
        %s1587 = sadd.s32 %s667, 10
        %s1588 = sld [smem:[#allocation7 + %s1587]]
        %v1589 = vstv %s1588
        %v1590 = vmul.f32 %v1589, %v1181
        %v1591 = vadd.f32 %v1586, %v1590
        %s1592 = sadd.s32 %s667, 11
        %s1593 = sld [smem:[#allocation7 + %s1592]]
        %v1594 = vstv %s1593
        %v1595 = vmul.f32 %v1594, %v1353
        %v1596 = vadd.f32 %v1591, %v1595
        %v1598 = vsel %vm1381, %v1596, 0
        %1600 = vmatprep.subr.mxu0 0.0
        %1601 = vmatpush1.msra.mxu0 %v647
        %1602 = vmatprep.subr.mxu0 0.0
        %1603 = vmatpush1.msra.mxu0 %v648
        %1604 = vmatprep.subr.mxu0 0.0
        %1605 = vmatpush1.msra.mxu0 0.0
        %1606 = vmatprep.subr.mxu0 0.0
        %1607 = vmatpush1.msra.mxu0 0.0
        %1608 = vmatprep.subr.mxu0 0.0
        %1609 = vmatpush1.msra.mxu0 0.0
        %1610 = vmatprep.subr.mxu0 0.0
        %1611 = vmatpush1.msra.mxu0 0.0
        %1612 = vmatprep.subr.mxu0 0.0
        %1613 = vmatpush1.msra.mxu0 0.0
        %1614 = vmatprep.subr.mxu0 0.0
        %1615 = vmatpush1.msra.mxu0 0.0
        %1616 = vmatprep.subr.mxu0 0.0
        %1617 = vmatpush1.msra.mxu0 0.0
        %1618 = vmatprep.subr.mxu0 0.0
        %1619 = vmatpush1.msra.mxu0 0.0
        %1620 = vmatprep.subr.mxu0 0.0
        %1621 = vmatpush1.msra.mxu0 0.0
        %1622 = vmatprep.subr.mxu0 0.0
        %1623 = vmatpush1.msra.mxu0 0.0
        %1624 = vmatprep.subr.mxu0 0.0
        %1625 = vmatpush1.msra.mxu0 0.0
        %1626 = vmatprep.subr.mxu0 0.0
        %1627 = vmatpush1.msra.mxu0 0.0
        %1628 = vmatprep.subr.mxu0 0.0
        %1629 = vmatpush1.msra.mxu0 0.0
        %1630 = vmatprep.subr.mxu0 0.0
        %1631 = vmatpush1.msra.mxu0 0.0
        %1632 = vmatprep.subr.mxu0 0.0
        %1633 = vmatpush1.msra.mxu0 0.0
        %1634 = vmatprep.subr.mxu0 0.0
        %1635 = vmatpush1.msra.mxu0 0.0
        %1636 = vmatprep.subr.mxu0 0.0
        %1637 = vmatpush1.msra.mxu0 0.0
        %1638 = vmatprep.subr.mxu0 0.0
        %1639 = vmatpush1.msra.mxu0 0.0
        %1640 = vmatprep.subr.mxu0 0.0
        %1641 = vmatpush1.msra.mxu0 0.0
        %1642 = vmatprep.subr.mxu0 0.0
        %1643 = vmatpush1.msra.mxu0 0.0
        %1644 = vmatprep.subr.mxu0 0.0
        %1645 = vmatpush1.msra.mxu0 0.0
        %1646 = vmatprep.subr.mxu0 0.0
        %1647 = vmatpush1.msra.mxu0 0.0
        %1648 = vmatprep.subr.mxu0 0.0
        %1649 = vmatpush1.msra.mxu0 0.0
        %1650 = vmatprep.subr.mxu0 0.0
        %1651 = vmatpush1.msra.mxu0 0.0
        %1652 = vmatprep.subr.mxu0 0.0
        %1653 = vmatpush1.msra.mxu0 0.0
        %1654 = vmatprep.subr.mxu0 0.0
        %1655 = vmatpush1.msra.mxu0 0.0
        %1656 = vmatprep.subr.mxu0 0.0
        %1657 = vmatpush1.msra.mxu0 0.0
        %1658 = vmatprep.subr.mxu0 0.0
        %1659 = vmatpush1.msra.mxu0 0.0
        %1660 = vmatprep.subr.mxu0 0.0
        %1661 = vmatpush1.msra.mxu0 0.0
        %1662 = vmatprep.subr.mxu0 0.0
        %1663 = vmatpush1.msra.mxu0 0.0
        %1664 = vmatprep.mubr.f32.mxu0 0.0
        %1665 = vmatmul.mubr.f32.gmra.mrb[0].mxu0 %v1598
        %v1666 = vpop.f32.mrb[0].mxu0
        %v1667 = vadd.f32 %v1379, %v1666
        %v1668 = vpop.f32.mrb[0].mxu0
        %1669 = vdwg.mxu0
        %v1670 = vsub.f32 %v1667, %v1033
        %v1671 = vstv %s1029
        %v1672 = vrcp.pop %v1671
        %s1673 = vtos %v1672
        %v1674 = vstv %s1673
        %v1675 = vmul.f32 %v1026, %v1674
        %v1676 = vmul.f32 %v1670, %v1675
        %v1677 = vadd.f32 %v1676, %v1017
        %s1678 = sld [smem:[#allocation10 + %s1028]]
        %v1679 = vstv %s1678
        %v1680 = vmul.f32 %v1679, %v1677
        %v1681 = vadd.f32 %v1573, %v1680
        %s1682 = sld [smem:[#allocation8 + %s1200]]
        %v1683 = vstv %s1682
        %v1684 = vadd.f32 %v1353, %v1683
        %s1685 = sadd.s32 %s667, 12
        %s1686 = sld [smem:[#allocation7 + %s1685]]
        %v1687 = vstv %s1686
        %v1688 = vmul.f32 %v1687, %v837
        %v1689 = vadd.f32 %v1684, %v1688
        %s1690 = sadd.s32 %s667, 13
        %s1691 = sld [smem:[#allocation7 + %s1690]]
        %v1692 = vstv %s1691
        %v1693 = vmul.f32 %v1692, %v1009
        %v1694 = vadd.f32 %v1689, %v1693
        %s1695 = sadd.s32 %s667, 14
        %s1696 = sld [smem:[#allocation7 + %s1695]]
        %v1697 = vstv %s1696
        %v1698 = vmul.f32 %v1697, %v1181
        %v1699 = vadd.f32 %v1694, %v1698
        %s1700 = sadd.s32 %s667, 15
        %s1701 = sld [smem:[#allocation7 + %s1700]]
        %v1702 = vstv %s1701
        %v1703 = vmul.f32 %v1702, %v1353
        %v1704 = vadd.f32 %v1699, %v1703
        %v1706 = vsel %vm1381, %v1704, 0
        %1708 = vmatprep.subr.mxu0 0.0
        %1709 = vmatpush1.msra.mxu0 %v647
        %1710 = vmatprep.subr.mxu0 0.0
        %1711 = vmatpush1.msra.mxu0 %v648
        %1712 = vmatprep.subr.mxu0 0.0
        %1713 = vmatpush1.msra.mxu0 0.0
        %1714 = vmatprep.subr.mxu0 0.0
        %1715 = vmatpush1.msra.mxu0 0.0
        %1716 = vmatprep.subr.mxu0 0.0
        %1717 = vmatpush1.msra.mxu0 0.0
        %1718 = vmatprep.subr.mxu0 0.0
        %1719 = vmatpush1.msra.mxu0 0.0
        %1720 = vmatprep.subr.mxu0 0.0
        %1721 = vmatpush1.msra.mxu0 0.0
        %1722 = vmatprep.subr.mxu0 0.0
        %1723 = vmatpush1.msra.mxu0 0.0
        %1724 = vmatprep.subr.mxu0 0.0
        %1725 = vmatpush1.msra.mxu0 0.0
        %1726 = vmatprep.subr.mxu0 0.0
        %1727 = vmatpush1.msra.mxu0 0.0
        %1728 = vmatprep.subr.mxu0 0.0
        %1729 = vmatpush1.msra.mxu0 0.0
        %1730 = vmatprep.subr.mxu0 0.0
        %1731 = vmatpush1.msra.mxu0 0.0
        %1732 = vmatprep.subr.mxu0 0.0
        %1733 = vmatpush1.msra.mxu0 0.0
        %1734 = vmatprep.subr.mxu0 0.0
        %1735 = vmatpush1.msra.mxu0 0.0
        %1736 = vmatprep.subr.mxu0 0.0
        %1737 = vmatpush1.msra.mxu0 0.0
        %1738 = vmatprep.subr.mxu0 0.0
        %1739 = vmatpush1.msra.mxu0 0.0
        %1740 = vmatprep.subr.mxu0 0.0
        %1741 = vmatpush1.msra.mxu0 0.0
        %1742 = vmatprep.subr.mxu0 0.0
        %1743 = vmatpush1.msra.mxu0 0.0
        %1744 = vmatprep.subr.mxu0 0.0
        %1745 = vmatpush1.msra.mxu0 0.0
        %1746 = vmatprep.subr.mxu0 0.0
        %1747 = vmatpush1.msra.mxu0 0.0
        %1748 = vmatprep.subr.mxu0 0.0
        %1749 = vmatpush1.msra.mxu0 0.0
        %1750 = vmatprep.subr.mxu0 0.0
        %1751 = vmatpush1.msra.mxu0 0.0
        %1752 = vmatprep.subr.mxu0 0.0
        %1753 = vmatpush1.msra.mxu0 0.0
        %1754 = vmatprep.subr.mxu0 0.0
        %1755 = vmatpush1.msra.mxu0 0.0
        %1756 = vmatprep.subr.mxu0 0.0
        %1757 = vmatpush1.msra.mxu0 0.0
        %1758 = vmatprep.subr.mxu0 0.0
        %1759 = vmatpush1.msra.mxu0 0.0
        %1760 = vmatprep.subr.mxu0 0.0
        %1761 = vmatpush1.msra.mxu0 0.0
        %1762 = vmatprep.subr.mxu0 0.0
        %1763 = vmatpush1.msra.mxu0 0.0
        %1764 = vmatprep.subr.mxu0 0.0
        %1765 = vmatpush1.msra.mxu0 0.0
        %1766 = vmatprep.subr.mxu0 0.0
        %1767 = vmatpush1.msra.mxu0 0.0
        %1768 = vmatprep.subr.mxu0 0.0
        %1769 = vmatpush1.msra.mxu0 0.0
        %1770 = vmatprep.subr.mxu0 0.0
        %1771 = vmatpush1.msra.mxu0 0.0
        %1772 = vmatprep.mubr.f32.mxu0 0.0
        %1773 = vmatmul.mubr.f32.gmra.mrb[0].mxu0 %v1706
        %v1774 = vpop.f32.mrb[0].mxu0
        %v1775 = vadd.f32 %v1379, %v1774
        %v1776 = vpop.f32.mrb[0].mxu0
        %1777 = vdwg.mxu0
        %v1778 = vsub.f32 %v1775, %v1205
        %v1779 = vstv %s1201
        %v1780 = vrcp.pop %v1779
        %s1781 = vtos %v1780
        %v1782 = vstv %s1781
        %v1783 = vmul.f32 %v1198, %v1782
        %v1784 = vmul.f32 %v1778, %v1783
        %v1785 = vadd.f32 %v1784, %v1189
        %s1786 = sld [smem:[#allocation10 + %s1200]]
        %v1787 = vstv %s1786
        %v1788 = vmul.f32 %v1787, %v1785
        %v1789 = vadd.f32 %v1681, %v1788
        %s1790 = sld [smem:[#allocation11 + %s667]]
        %v1791 = vstv %s1790
        %v1792 = vadd.f32 %v1789, %v1791
        %1793 = vst.msk [vmem:[%s608] sm:$0xff] %vm1381, %v1792
        %s1794 = sand.u32 %s363, 1
        %s1795 = scalar_lea.sflag [#allocation3], %s1794
        %s1796 = sand.u32 %s363, 1
        %s1797 = smul.addr %s1796, 8
        %s1798 = scalar_lea.vmem [#allocation13], %s1797
        // Predicated region
        $region97: #{tpu_custom_call.1} parent=71 // pred_check
          %p1799 = pneg %p373
        $region98: #{tpu_custom_call.1} parent=71 // pred_check_branch
          %1801 = sbr.rel (%p1799) target = $region100
        $region99: #{tpu_custom_call.1} parent=71 // pred_region
          %s1803 = ssub.s32 128, 128
          %1804 = vsyncadd %s1795, %s1803
          %s1805 = sadd.s32 %s36, %s35
          %s1806 = smul.addr %s1805, 128
          %s1807 = scalar_lea.hbm %s13, %s1806
          %s1809 = sshll.u32 %s1798, 4
          %s1810 = int_to_ptr.vmem [resolvable:$true] %s1809
          %1812 = dma.vmem_to_hbm [thread:$0]  %s1810, 128, %s1807, %s1795
        $region100: #{tpu_custom_call.1} parent=71 // pred_fallthru
          _
      $region72: #{tpu_custom_call.1} parent=5 // pred_fallthru
        _
      %p1813 = scmp.le.s32.totalorder 2, %s26
      // Predicated region
      $region101: #{tpu_custom_call.1} parent=5 // pred_check
        %p1814 = pneg %p1813
      $region102: #{tpu_custom_call.1} parent=5 // pred_check_branch
        %1816 = sbr.rel (%p1814) target = $region104
      $region103: #{tpu_custom_call.1} parent=5 // pred_region
        %s1817 = ssub.s32 %s26, 2
        // Predicated region
        $region105: #{tpu_custom_call.1} parent=103 // pred_check
          %p1818 = pneg %p379
        $region106: #{tpu_custom_call.1} parent=103 // pred_check_branch
          %1820 = sbr.rel (%p1818) target = $region108
        $region107: #{tpu_custom_call.1} parent=103 // pred_region
          %s1821 = sand.u32 %s364, 1
          %s1822 = scalar_lea.sflag [#allocation3], %s1821
          %s1823 = sand.u32 %s364, 1
          %s1824 = smul.addr %s1823, 8
          %s1825 = scalar_lea.vmem [#allocation13], %s1824
          %1826 = dma.done %s1822, 128
        $region108: #{tpu_custom_call.1} parent=103 // pred_fallthru
          _
      $region104: #{tpu_custom_call.1} parent=5 // pred_fallthru
        _
    $region6: #{tpu_custom_call.1} parent=1 // loop_footer
      %s30 = sadd.s32 1, %s26
    $region7: #{tpu_custom_call.1} parent=1 // loop_footer_branch
      %25 = sbr.rel target = $region3
    $region8: #{tpu_custom_call.1} parent=1 // loop_exit
      _
    %1827 = vsyncpa [#allocation3], 1
    %s1828 = scalar_lea.sflag [#allocation3], 1
    %1829 = vsyncpa %s1828, 1
    %1830 = vsyncpa [#allocation4], 1
    %s1831 = scalar_lea.sflag [#allocation4], 1
    %1832 = vsyncpa %s1831, 1
    %1833 = vsyncpa [#allocation6], 1
    %1834 = vsyncpa [#allocation9], 1
    %1835 = vsyncpa [#allocation12], 1

</llo_original>
